<compile_context>
chip_gen: v7x
topology: tpu7x:2x2x1
jax: 0.10.0
libtpu: 0.0.40
codegen_flags: <defaults>
</compile_context>

<pallas_src>
import functools

import jax
import jax.numpy as jnp
import numpy as np
from jax.experimental import pallas as pl
from jax.experimental.pallas import tpu as pltpu

# ---------------- configuration (matches the PyTorch module defaults) --------
FEATURE_SIZES = [1] * 26 + [10] * 10      # 26 continuous fields + 10 categorical
FIELD_SIZE = len(FEATURE_SIZES)           # 36
EMB_SIZE = 4                              # embedding_size
HIDDEN_DIMS = [32, 32]                    # hidden_dims
BN_EPS = 1e-5
N = 8                                     # small batch

N_CONT = 26                               # continuous fields
N_CAT = 10                                # categorical fields
CAT_VOCAB = FEATURE_SIZES[26]             # 10
D_EMB = FIELD_SIZE * EMB_SIZE             # 144
D_CONT = N_CONT * EMB_SIZE                # 104
D_CAT = N_CAT * EMB_SIZE                  # 40
H1, H2 = HIDDEN_DIMS                      # 32, 32
SAUG_COLS = 8                             # selection-matrix width (4 sums + ones + pad)

# Row offsets inside the packed parameter slabs (all multiples of 8 so that the
# in-kernel static slices stay sublane-aligned).
WD_W, WD_B, WD_ROWS = 0, 32, 64           # block-diag lin_w / lin_b      (64, 104)
CATP_VCODE, CATP_R, CATP_ROWS = 0, 8, 18  # lane codes / replication       (18, 100)
PP_W2 = 0                                 # w2                             (80, 32)
PP_B1, PP_G1, PP_BE1 = 32, 40, 48
PP_B2, PP_G2, PP_BE2 = 56, 64, 72
PP_ROWS = 80


# ---------------- shared forward math -----------------------------------------
# Pure jnp; traced both inside the Pallas kernel (Mosaic) and as the XLA
# reference, so kernel and reference share the exact formulation.
def _forward_math(xi, xv, bias, wd, catp, tcat, w1s, pp, *, precision=None):
    dot = functools.partial(jnp.dot, precision=precision,
                            preferred_element_type=jnp.float32)

    xi_c, xi_k = xi[:, :N_CONT], xi[:, N_CONT:]
    xv_c, xv_k = xv[:, :N_CONT], xv[:, N_CONT:]

    # ---- field embeddings (fused; formerly a separate XLA "glue" stage) ----
    # Continuous fields: Xv * (Xi * lin_w + lin_b), laid out as the (N, 104)
    # slice of emb2, computed as two small MXU matmuls against block-diagonal
    # expansions of the per-field Linear(1, E) weights / biases.
    w_cont = wd[WD_W:WD_W + N_CONT, :]                                # (26, 104)
    b_cont = wd[WD_B:WD_B + N_CONT, :]                                # (26, 104)
    emb2_cont = dot(xv_c * xi_c, w_cont) + dot(xv_c, b_cont)          # (N, 104)

    # Categorical fields: embedding lookup as a scaled one-hot matmul against
    # the block-diagonal table.  The index expansion uses a 0/1 replication
    # matrix, so the equality compare below is exact.
    vcode = catp[CATP_VCODE:CATP_VCODE + 1, :]                        # (1, 100)
    rrep = catp[CATP_R:CATP_R + N_CAT, :]                             # (10, 100)
    idx_e = dot(xi_k, rrep)                                           # (N, 100)
    xv_e = dot(xv_k, rrep)                                            # (N, 100)
    onehot = jnp.where(idx_e == vcode, xv_e, 0.0)                     # (N, 100)
    emb2_cat = dot(onehot, tcat)                                      # (N, 40)

    # ---- packed weights -----------------------------------------------------
    w1_a = w1s[:D_CONT, :H1]
    w1_b = w1s[D_CONT:, :H1]
    s_a = w1s[:D_CONT, H1:H1 + SAUG_COLS]
    s_b = w1s[D_CONT:, H1:H1 + SAUG_COLS]
    w2 = pp[PP_W2:PP_W2 + H1, :]
    b1 = pp[PP_B1:PP_B1 + 1, :]
    g1 = pp[PP_G1:PP_G1 + 1, :]
    be1 = pp[PP_BE1:PP_BE1 + 1, :]
    b2 = pp[PP_B2:PP_B2 + 1, :]
    g2 = pp[PP_G2:PP_G2 + 1, :]
    be2 = pp[PP_BE2:PP_BE2 + 1, :]

    # ---- FM part: first/second-order sums on the MXU ------------------------
    # cols 0..3 of s_a/s_b sum per embedding dim over fields, col 4 is a ones
    # column giving the first-order sum.
    t = dot(emb2_cont, s_a) + dot(emb2_cat, s_b)                      # (N, 8)
    q = dot(emb2_cont * emb2_cont, s_a) + dot(emb2_cat * emb2_cat, s_b)
    s_vec = t[:, :EMB_SIZE]                                           # (N, E)
    first_sum = t[:, EMB_SIZE:EMB_SIZE + 1]                           # (N, 1)
    sq_vec = q[:, :EMB_SIZE]                                          # (N, E)
    second = 0.5 * (s_vec * s_vec - sq_vec)                           # (N, E)
    second_sum = jnp.sum(second, axis=1, keepdims=True)               # only 4 lanes

    # ---- deep part (Linear -> train-mode BatchNorm -> dropout[identity]) ----
    h = dot(emb2_cont, w1_a) + dot(emb2_cat, w1_b) + b1               # (N, 32)
    mu = jnp.mean(h, axis=0, keepdims=True)
    var = jnp.mean(jnp.square(h - mu), axis=0, keepdims=True)
    scale = g1 * jax.lax.rsqrt(var + BN_EPS)
    h = h * scale + (be1 - mu * scale)
    # TODO(synk): nn.Dropout in train mode is stochastic; identity (eval) here.
    h = dot(h, w2) + b2
    mu2 = jnp.mean(h, axis=0, keepdims=True)
    var2 = jnp.mean(jnp.square(h - mu2), axis=0, keepdims=True)
    scale2 = g2 * jax.lax.rsqrt(var2 + BN_EPS)
    h = h * scale2 + (be2 - mu2 * scale2)

    # per-row reduction of the deep output on the MXU (ones-column matmul)
    deep_sum = dot(h, jnp.ones((H2, 1), jnp.float32))                 # (N, 1)

    return first_sum + second_sum + deep_sum + bias


# ---------------- Pallas kernel ------------------------------------------------
def deepfm_kernel(xi_ref, xv_ref, bias_ref, wd_ref, catp_ref, tcat_ref,
                  w1s_ref, pp_ref, out_ref):
    out_ref[...] = _forward_math(
        xi_ref[...], xv_ref[...], bias_ref[...], wd_ref[...], catp_ref[...],
        tcat_ref[...], w1s_ref[...], pp_ref[...])


def _full_spec(shape):
    nd = len(shape)
    return pl.BlockSpec(shape, lambda i, nd=nd: (0,) * nd)


@jax.jit
def deepfm_pallas(Xi, Xv, bias, wd, catp, tcat, w1s, pp):
    n = Xi.shape[0]
    xi2 = Xi[:, :, 0]                    # (N, F): squeeze the trailing dim
    bias2 = bias.reshape(n, 1)
    args = (xi2, Xv, bias2, wd, catp, tcat, w1s, pp)
    # N=8: one grid step, full-array blocks, everything resident in VMEM.
    # For realistic batches (N >= 256): tile the batch with grid=(cdiv(N, TN),),
    # mark it "parallel" (megacore / v7x dual-TC), keep the weight slabs on
    # constant index_maps, emit a lane-dense (1, TN) output block, and add a
    # cross-tile sum / sum-of-squares accumulator for the train-mode BN stats.
    out = pl.pallas_call(
        deepfm_kernel,
        grid=(1,),
        in_specs=[_full_spec(a.shape) for a in args],
        out_specs=_full_spec((n, 1)),
        out_shape=jax.ShapeDtypeStruct((n, 1), jnp.float32),
        compiler_params=pltpu.CompilerParams(
            dimension_semantics=("arbitrary",)),
    )(*args)
    return out[:, 0]


# ---------------- parameter packing (done once, off the hot path) -------------
def pack_params(lin_w, lin_b, emb_tables, w1, b1, g1, be1, w2, b2, g2, be2):
    lin_w = np.asarray(lin_w, np.float32)
    lin_b = np.asarray(lin_b, np.float32)
    emb_tables = np.asarray(emb_tables, np.float32)
    E = EMB_SIZE

    # block-diagonal expansions of the per-field Linear(1, E) weight / bias
    wd = np.zeros((WD_ROWS, D_CONT), np.float32)
    for f in range(N_CONT):
        wd[WD_W + f, f * E:(f + 1) * E] = lin_w[f]
        wd[WD_B + f, f * E:(f + 1) * E] = lin_b[f]

    # lane codes + per-field replication matrix for the one-hot lookup
    catp = np.zeros((CATP_ROWS, N_CAT * CAT_VOCAB), np.float32)
    catp[CATP_VCODE, :] = np.tile(np.arange(CAT_VOCAB, dtype=np.float32), N_CAT)
    for f in range(N_CAT):
        catp[CATP_R + f, f * CAT_VOCAB:(f + 1) * CAT_VOCAB] = 1.0

    # block-diagonal embedding tables
    tcat = np.zeros((N_CAT * CAT_VOCAB, D_CAT), np.float32)
    for f in range(N_CAT):
        tcat[f * CAT_VOCAB:(f + 1) * CAT_VOCAB, f * E:(f + 1) * E] = emb_tables[f]

    # field-selection matrix (FM sums) packed next to w1: (144, 32 + 8)
    s_aug = np.zeros((D_EMB, SAUG_COLS), np.float32)
    for j in range(D_EMB):
        s_aug[j, j % E] = 1.0            # per-embedding-dim field sum
    s_aug[:, E] = 1.0                    # ones column -> first-order sum
    w1s = np.concatenate([np.asarray(w1, np.float32), s_aug], axis=1)

    # w2 + all BatchNorm / bias vectors in one sublane-aligned slab
    pp = np.zeros((PP_ROWS, H1), np.float32)
    pp[PP_W2:PP_W2 + H1, :] = np.asarray(w2, np.float32)
    pp[PP_B1, :] = np.asarray(b1, np.float32).reshape(-1)
    pp[PP_G1, :] = np.asarray(g1, np.float32).reshape(-1)
    pp[PP_BE1, :] = np.asarray(be1, np.float32).reshape(-1)
    pp[PP_B2, :] = np.asarray(b2, np.float32).reshape(-1)
    pp[PP_G2, :] = np.asarray(g2, np.float32).reshape(-1)
    pp[PP_BE2, :] = np.asarray(be2, np.float32).reshape(-1)

    return (jnp.asarray(wd), jnp.asarray(catp), jnp.asarray(tcat),
            jnp.asarray(w1s), jnp.asarray(pp))


# ---------------- pure-JAX semantic reference (PyTorch-style, elementwise) ----
def ref_forward_semantic(Xi, Xv, bias, lin_w, lin_b, emb_tables,
                         w1, b1, g1, be1, w2, b2, g2, be2):
    hi = jax.lax.Precision.HIGHEST
    n = Xi.shape[0]
    x_cont = Xi[:, :N_CONT, 0:1]                                   # (N, 26, 1)
    e_cont = (x_cont * lin_w[None] + lin_b[None]) * Xv[:, :N_CONT, None]
    idx = Xi[:, N_CONT:, 0].astype(jnp.int32)                      # (N, 10)
    e_cat = emb_tables[jnp.arange(N_CAT)[None, :], idx] * Xv[:, N_CONT:, None]
    emb3 = jnp.concatenate([e_cont, e_cat], axis=1)                # (N, F, E)
    emb2 = emb3.reshape(n, D_EMB)

    first = jnp.sum(emb2, axis=1)
    s = jnp.sum(emb3, axis=1)
    sq = jnp.sum(emb3 * emb3, axis=1)
    second = jnp.sum(0.5 * (s * s - sq), axis=1)

    h = jnp.dot(emb2, w1, precision=hi) + b1
    mu = jnp.mean(h, 0, keepdims=True)
    var = jnp.mean((h - mu) ** 2, 0, keepdims=True)
    h = g1 * (h - mu) / jnp.sqrt(var + BN_EPS) + be1
    h = jnp.dot(h, w2, precision=hi) + b2
    mu2 = jnp.mean(h, 0, keepdims=True)
    var2 = jnp.mean((h - mu2) ** 2, 0, keepdims=True)
    h = g2 * (h - mu2) / jnp.sqrt(var2 + BN_EPS) + be2
    deep = jnp.sum(h, axis=1)
    return first + second + deep + bias


# ---------------- main ---------------------------------------------------------
if __name__ == "__main__":
    key = jax.random.PRNGKey(0)
    ks = jax.random.split(key, 16)

    # parameters (deterministic init)
    lin_w = 0.1 * jax.random.normal(ks[0], (N_CONT, EMB_SIZE), jnp.float32)
    lin_b = 0.1 * jax.random.normal(ks[1], (N_CONT, EMB_SIZE), jnp.float32)
    emb_tables = 0.1 * jax.random.normal(ks[2], (N_CAT, CAT_VOCAB, EMB_SIZE), jnp.float32)

    w1 = 0.1 * jax.random.normal(ks[3], (D_EMB, H1), jnp.float32)
    b1 = 0.1 * jax.random.normal(ks[4], (1, H1), jnp.float32)
    g1 = jnp.ones((1, H1), jnp.float32)
    be1 = jnp.zeros((1, H1), jnp.float32)
    w2 = 0.1 * jax.random.normal(ks[5], (H1, H2), jnp.float32)
    b2 = 0.1 * jax.random.normal(ks[6], (1, H2), jnp.float32)
    g2 = jnp.ones((1, H2), jnp.float32)
    be2 = jnp.zeros((1, H2), jnp.float32)

    # the PyTorch forward re-samples bias = randn(N) each call; here it is a
    # deterministic per-row bias vector.
    bias = jax.random.normal(ks[7], (N,), jnp.float32)

    # inputs
    xi_cont = jax.random.normal(ks[8], (N, N_CONT, 1), jnp.float32)
    xi_cat = jax.random.randint(ks[9], (N, N_CAT, 1), 0, CAT_VOCAB).astype(jnp.float32)
    Xi = jnp.concatenate([xi_cont, xi_cat], axis=1)                 # (N, 36, 1)
    Xv = jax.random.normal(ks[10], (N, FIELD_SIZE), jnp.float32)    # (N, 36)

    # one-time parameter packing (block-diagonal slabs)
    wd, catp, tcat, w1s, pp = pack_params(
        lin_w, lin_b, emb_tables, w1, b1, g1, be1, w2, b2, g2, be2)

    # fused Pallas kernel
    out = deepfm_pallas(Xi, Xv, bias, wd, catp, tcat, w1s, pp)
    out = jax.block_until_ready(out)

    # references
    xi2 = Xi[:, :, 0]
    bias2 = bias.reshape(N, 1)
    ref_packed = _forward_math(xi2, Xv, bias2, wd, catp, tcat, w1s, pp)[:, 0]
    ref_packed_hi = _forward_math(xi2, Xv, bias2, wd, catp, tcat, w1s, pp,
                                  precision=jax.lax.Precision.HIGHEST)[:, 0]
    ref_sem = ref_forward_semantic(Xi, Xv, bias, lin_w, lin_b, emb_tables,
                                   w1, b1, g1, be1, w2, b2, g2, be2)

    # (1) the packed/block-diagonal formulation matches the PyTorch-style
    #     elementwise math (pure XLA, f32-accurate on both sides)
    np.testing.assert_allclose(np.asarray(ref_packed_hi), np.asarray(ref_sem),
                               rtol=1e-4, atol=1e-4)
    # (2) the Pallas kernel matches the identically-formulated XLA reference
    np.testing.assert_allclose(np.asarray(out), np.asarray(ref_packed),
                               rtol=2e-4, atol=2e-4)

    print("KERNEL_OK")
</pallas_src>

<mosaic_0001>
module attributes {stable_mosaic.version = 11 : i64} {
  func.func @deepfm_kernel(%arg0: i32, %arg1: memref<8x36xf32, #tpu.memory_space<vmem>>, %arg2: memref<8x36xf32, #tpu.memory_space<vmem>>, %arg3: memref<8x1xf32, #tpu.memory_space<vmem>>, %arg4: memref<64x104xf32, #tpu.memory_space<vmem>>, %arg5: memref<18x100xf32, #tpu.memory_space<vmem>>, %arg6: memref<100x40xf32, #tpu.memory_space<vmem>>, %arg7: memref<144x40xf32, #tpu.memory_space<vmem>>, %arg8: memref<80x32xf32, #tpu.memory_space<vmem>>, %arg9: memref<8x1xf32, #tpu.memory_space<vmem>>) attributes {dimension_semantics = [#tpu.dimension_semantics<arbitrary>], iteration_bounds = array<i64: 1>, scalar_prefetch = 0 : i64, scratch_operands = 0 : i64, tpu.core_type = #tpu.core_type<tc>, window_params = [{pipeline_mode = #tpu.pipeline_mode<synchronous>, transform_indices = @transform_0, window_bounds = array<i64: 8, 36>}, {pipeline_mode = #tpu.pipeline_mode<synchronous>, transform_indices = @transform_1, window_bounds = array<i64: 8, 36>}, {pipeline_mode = #tpu.pipeline_mode<synchronous>, transform_indices = @transform_2, window_bounds = array<i64: 8, 1>}, {pipeline_mode = #tpu.pipeline_mode<synchronous>, transform_indices = @transform_3, window_bounds = array<i64: 64, 104>}, {pipeline_mode = #tpu.pipeline_mode<synchronous>, transform_indices = @transform_4, window_bounds = array<i64: 18, 100>}, {pipeline_mode = #tpu.pipeline_mode<synchronous>, transform_indices = @transform_5, window_bounds = array<i64: 100, 40>}, {pipeline_mode = #tpu.pipeline_mode<synchronous>, transform_indices = @transform_6, window_bounds = array<i64: 144, 40>}, {pipeline_mode = #tpu.pipeline_mode<synchronous>, transform_indices = @transform_7, window_bounds = array<i64: 80, 32>}, {pipeline_mode = #tpu.pipeline_mode<synchronous>, transform_indices = @transform_8, window_bounds = array<i64: 8, 1>}]} {
    %c0 = arith.constant 0 : index
    %c0_0 = arith.constant 0 : index
    %0 = vector.load %arg1[%c0, %c0_0] : memref<8x36xf32, #tpu.memory_space<vmem>>, vector<8x36xf32>
    %c0_1 = arith.constant 0 : index
    %c0_2 = arith.constant 0 : index
    %1 = vector.load %arg2[%c0_1, %c0_2] : memref<8x36xf32, #tpu.memory_space<vmem>>, vector<8x36xf32>
    %c0_3 = arith.constant 0 : index
    %c0_4 = arith.constant 0 : index
    %2 = vector.load %arg3[%c0_3, %c0_4] : memref<8x1xf32, #tpu.memory_space<vmem>>, vector<8x1xf32>
    %c0_5 = arith.constant 0 : index
    %c0_6 = arith.constant 0 : index
    %3 = vector.load %arg4[%c0_5, %c0_6] : memref<64x104xf32, #tpu.memory_space<vmem>>, vector<64x104xf32>
    %c0_7 = arith.constant 0 : index
    %c0_8 = arith.constant 0 : index
    %4 = vector.load %arg5[%c0_7, %c0_8] : memref<18x100xf32, #tpu.memory_space<vmem>>, vector<18x100xf32>
    %c0_9 = arith.constant 0 : index
    %c0_10 = arith.constant 0 : index
    %5 = vector.load %arg6[%c0_9, %c0_10] : memref<100x40xf32, #tpu.memory_space<vmem>>, vector<100x40xf32>
    %c0_11 = arith.constant 0 : index
    %c0_12 = arith.constant 0 : index
    %6 = vector.load %arg7[%c0_11, %c0_12] : memref<144x40xf32, #tpu.memory_space<vmem>>, vector<144x40xf32>
    %c0_13 = arith.constant 0 : index
    %c0_14 = arith.constant 0 : index
    %7 = vector.load %arg8[%c0_13, %c0_14] : memref<80x32xf32, #tpu.memory_space<vmem>>, vector<80x32xf32>
    %8 = vector.extract_strided_slice %0 {offsets = [0, 0], sizes = [8, 26], strides = [1, 1]} : vector<8x36xf32> to vector<8x26xf32>
    %9 = vector.extract_strided_slice %0 {offsets = [0, 26], sizes = [8, 10], strides = [1, 1]} : vector<8x36xf32> to vector<8x10xf32>
    %10 = vector.extract_strided_slice %1 {offsets = [0, 0], sizes = [8, 26], strides = [1, 1]} : vector<8x36xf32> to vector<8x26xf32>
    %11 = vector.extract_strided_slice %1 {offsets = [0, 26], sizes = [8, 10], strides = [1, 1]} : vector<8x36xf32> to vector<8x10xf32>
    %12 = vector.extract_strided_slice %3 {offsets = [0, 0], sizes = [26, 104], strides = [1, 1]} : vector<64x104xf32> to vector<26x104xf32>
    %13 = vector.extract_strided_slice %3 {offsets = [32, 0], sizes = [26, 104], strides = [1, 1]} : vector<64x104xf32> to vector<26x104xf32>
    %14 = arith.mulf %10, %8 : vector<8x26xf32>
    %cst = arith.constant dense<0.000000e+00> : vector<8x104xf32>
    %15 = tpu.matmul %14, %12, %cst {dimension_numbers = #tpu.dot_dimension_numbers<[1], [0], [0], [1], [0, 0, 1, 1], [], []>} : vector<8x26xf32>, vector<26x104xf32>, vector<8x104xf32> -> vector<8x104xf32>
    %cst_15 = arith.constant dense<0.000000e+00> : vector<8x104xf32>
    %16 = tpu.matmul %10, %13, %cst_15 {dimension_numbers = #tpu.dot_dimension_numbers<[1], [0], [0], [1], [0, 0, 1, 1], [], []>} : vector<8x26xf32>, vector<26x104xf32>, vector<8x104xf32> -> vector<8x104xf32>
    %17 = arith.addf %15, %16 : vector<8x104xf32>
    %18 = vector.extract_strided_slice %4 {offsets = [0, 0], sizes = [1, 100], strides = [1, 1]} : vector<18x100xf32> to vector<1x100xf32>
    %19 = vector.extract_strided_slice %4 {offsets = [8, 0], sizes = [10, 100], strides = [1, 1]} : vector<18x100xf32> to vector<10x100xf32>
    %cst_16 = arith.constant dense<0.000000e+00> : vector<8x100xf32>
    %20 = tpu.matmul %9, %19, %cst_16 {dimension_numbers = #tpu.dot_dimension_numbers<[1], [0], [0], [1], [0, 0, 1, 1], [], []>} : vector<8x10xf32>, vector<10x100xf32>, vector<8x100xf32> -> vector<8x100xf32>
    %cst_17 = arith.constant dense<0.000000e+00> : vector<8x100xf32>
    %21 = tpu.matmul %11, %19, %cst_17 {dimension_numbers = #tpu.dot_dimension_numbers<[1], [0], [0], [1], [0, 0, 1, 1], [], []>} : vector<8x10xf32>, vector<10x100xf32>, vector<8x100xf32> -> vector<8x100xf32>
    %22 = vector.broadcast %18 : vector<1x100xf32> to vector<8x100xf32>
    %23 = arith.cmpf oeq, %20, %22 : vector<8x100xf32>
    %cst_18 = arith.constant 0.000000e+00 : f32
    %24 = vector.broadcast %cst_18 : f32 to vector<8x100xf32>
    %25 = arith.select %23, %21, %24 : vector<8x100xi1>, vector<8x100xf32>
    %cst_19 = arith.constant dense<0.000000e+00> : vector<8x40xf32>
    %26 = tpu.matmul %25, %5, %cst_19 {dimension_numbers = #tpu.dot_dimension_numbers<[1], [0], [0], [1], [0, 0, 1, 1], [], []>} : vector<8x100xf32>, vector<100x40xf32>, vector<8x40xf32> -> vector<8x40xf32>
    %27 = vector.extract_strided_slice %6 {offsets = [0, 0], sizes = [104, 32], strides = [1, 1]} : vector<144x40xf32> to vector<104x32xf32>
    %28 = vector.extract_strided_slice %6 {offsets = [104, 0], sizes = [40, 32], strides = [1, 1]} : vector<144x40xf32> to vector<40x32xf32>
    %29 = vector.extract_strided_slice %6 {offsets = [0, 32], sizes = [104, 8], strides = [1, 1]} : vector<144x40xf32> to vector<104x8xf32>
    %30 = vector.extract_strided_slice %6 {offsets = [104, 32], sizes = [40, 8], strides = [1, 1]} : vector<144x40xf32> to vector<40x8xf32>
    %31 = vector.extract_strided_slice %7 {offsets = [0, 0], sizes = [32, 32], strides = [1, 1]} : vector<80x32xf32> to vector<32x32xf32>
    %32 = vector.extract_strided_slice %7 {offsets = [32, 0], sizes = [1, 32], strides = [1, 1]} : vector<80x32xf32> to vector<1x32xf32>
    %33 = vector.extract_strided_slice %7 {offsets = [40, 0], sizes = [1, 32], strides = [1, 1]} : vector<80x32xf32> to vector<1x32xf32>
    %34 = vector.extract_strided_slice %7 {offsets = [48, 0], sizes = [1, 32], strides = [1, 1]} : vector<80x32xf32> to vector<1x32xf32>
    %35 = vector.extract_strided_slice %7 {offsets = [56, 0], sizes = [1, 32], strides = [1, 1]} : vector<80x32xf32> to vector<1x32xf32>
    %36 = vector.extract_strided_slice %7 {offsets = [64, 0], sizes = [1, 32], strides = [1, 1]} : vector<80x32xf32> to vector<1x32xf32>
    %37 = vector.extract_strided_slice %7 {offsets = [72, 0], sizes = [1, 32], strides = [1, 1]} : vector<80x32xf32> to vector<1x32xf32>
    %cst_20 = arith.constant dense<0.000000e+00> : vector<8x8xf32>
    %38 = tpu.matmul %17, %29, %cst_20 {dimension_numbers = #tpu.dot_dimension_numbers<[1], [0], [0], [1], [0, 0, 1, 1], [], []>} : vector<8x104xf32>, vector<104x8xf32>, vector<8x8xf32> -> vector<8x8xf32>
    %cst_21 = arith.constant dense<0.000000e+00> : vector<8x8xf32>
    %39 = tpu.matmul %26, %30, %cst_21 {dimension_numbers = #tpu.dot_dimension_numbers<[1], [0], [0], [1], [0, 0, 1, 1], [], []>} : vector<8x40xf32>, vector<40x8xf32>, vector<8x8xf32> -> vector<8x8xf32>
    %40 = arith.addf %38, %39 : vector<8x8xf32>
    %41 = arith.mulf %17, %17 : vector<8x104xf32>
    %cst_22 = arith.constant dense<0.000000e+00> : vector<8x8xf32>
    %42 = tpu.matmul %41, %29, %cst_22 {dimension_numbers = #tpu.dot_dimension_numbers<[1], [0], [0], [1], [0, 0, 1, 1], [], []>} : vector<8x104xf32>, vector<104x8xf32>, vector<8x8xf32> -> vector<8x8xf32>
    %43 = arith.mulf %26, %26 : vector<8x40xf32>
    %cst_23 = arith.constant dense<0.000000e+00> : vector<8x8xf32>
    %44 = tpu.matmul %43, %30, %cst_23 {dimension_numbers = #tpu.dot_dimension_numbers<[1], [0], [0], [1], [0, 0, 1, 1], [], []>} : vector<8x40xf32>, vector<40x8xf32>, vector<8x8xf32> -> vector<8x8xf32>
    %45 = arith.addf %42, %44 : vector<8x8xf32>
    %46 = vector.extract_strided_slice %40 {offsets = [0, 0], sizes = [8, 4], strides = [1, 1]} : vector<8x8xf32> to vector<8x4xf32>
    %47 = vector.extract_strided_slice %40 {offsets = [0, 4], sizes = [8, 1], strides = [1, 1]} : vector<8x8xf32> to vector<8x1xf32>
    %48 = vector.extract_strided_slice %45 {offsets = [0, 0], sizes = [8, 4], strides = [1, 1]} : vector<8x8xf32> to vector<8x4xf32>
    %49 = arith.mulf %46, %46 : vector<8x4xf32>
    %50 = arith.subf %49, %48 : vector<8x4xf32>
    %cst_24 = arith.constant 5.000000e-01 : f32
    %51 = vector.broadcast %cst_24 : f32 to vector<8x4xf32>
    %52 = arith.mulf %51, %50 : vector<8x4xf32>
    %cst_25 = arith.constant dense<0.000000e+00> : vector<8xf32>
    %53 = vector.multi_reduction <add>, %52, %cst_25 [1] : vector<8x4xf32> to vector<8xf32>
    %54 = vector.shape_cast %53 : vector<8xf32> to vector<8x1xf32>
    %cst_26 = arith.constant dense<0.000000e+00> : vector<8x32xf32>
    %55 = tpu.matmul %17, %27, %cst_26 {dimension_numbers = #tpu.dot_dimension_numbers<[1], [0], [0], [1], [0, 0, 1, 1], [], []>} : vector<8x104xf32>, vector<104x32xf32>, vector<8x32xf32> -> vector<8x32xf32>
    %cst_27 = arith.constant dense<0.000000e+00> : vector<8x32xf32>
    %56 = tpu.matmul %26, %28, %cst_27 {dimension_numbers = #tpu.dot_dimension_numbers<[1], [0], [0], [1], [0, 0, 1, 1], [], []>} : vector<8x40xf32>, vector<40x32xf32>, vector<8x32xf32> -> vector<8x32xf32>
    %57 = arith.addf %55, %56 : vector<8x32xf32>
    %58 = vector.broadcast %32 : vector<1x32xf32> to vector<8x32xf32>
    %59 = arith.addf %57, %58 : vector<8x32xf32>
    %cst_28 = arith.constant dense<0.000000e+00> : vector<32xf32>
    %60 = vector.multi_reduction <add>, %59, %cst_28 [0] : vector<8x32xf32> to vector<32xf32>
    %61 = vector.shape_cast %60 : vector<32xf32> to vector<1x32xf32>
    %cst_29 = arith.constant 8.000000e+00 : f32
    %62 = vector.broadcast %cst_29 : f32 to vector<1x32xf32>
    %63 = arith.divf %61, %62 : vector<1x32xf32>
    %64 = vector.broadcast %63 : vector<1x32xf32> to vector<8x32xf32>
    %65 = arith.subf %59, %64 : vector<8x32xf32>
    %66 = arith.mulf %65, %65 : vector<8x32xf32>
    %cst_30 = arith.constant dense<0.000000e+00> : vector<32xf32>
    %67 = vector.multi_reduction <add>, %66, %cst_30 [0] : vector<8x32xf32> to vector<32xf32>
    %68 = vector.shape_cast %67 : vector<32xf32> to vector<1x32xf32>
    %cst_31 = arith.constant 8.000000e+00 : f32
    %69 = vector.broadcast %cst_31 : f32 to vector<1x32xf32>
    %70 = arith.divf %68, %69 : vector<1x32xf32>
    %cst_32 = arith.constant 9.99999974E-6 : f32
    %71 = vector.broadcast %cst_32 : f32 to vector<1x32xf32>
    %72 = arith.addf %70, %71 : vector<1x32xf32>
    %73 = math.rsqrt %72 : vector<1x32xf32>
    %74 = arith.mulf %33, %73 : vector<1x32xf32>
    %75 = vector.broadcast %74 : vector<1x32xf32> to vector<8x32xf32>
    %76 = arith.mulf %59, %75 : vector<8x32xf32>
    %77 = arith.mulf %63, %74 : vector<1x32xf32>
    %78 = arith.subf %34, %77 : vector<1x32xf32>
    %79 = vector.broadcast %78 : vector<1x32xf32> to vector<8x32xf32>
    %80 = arith.addf %76, %79 : vector<8x32xf32>
    %cst_33 = arith.constant dense<0.000000e+00> : vector<8x32xf32>
    %81 = tpu.matmul %80, %31, %cst_33 {dimension_numbers = #tpu.dot_dimension_numbers<[1], [0], [0], [1], [0, 0, 1, 1], [], []>} : vector<8x32xf32>, vector<32x32xf32>, vector<8x32xf32> -> vector<8x32xf32>
    %82 = vector.broadcast %35 : vector<1x32xf32> to vector<8x32xf32>
    %83 = arith.addf %81, %82 : vector<8x32xf32>
    %cst_34 = arith.constant dense<0.000000e+00> : vector<32xf32>
    %84 = vector.multi_reduction <add>, %83, %cst_34 [0] : vector<8x32xf32> to vector<32xf32>
    %85 = vector.shape_cast %84 : vector<32xf32> to vector<1x32xf32>
    %cst_35 = arith.constant 8.000000e+00 : f32
    %86 = vector.broadcast %cst_35 : f32 to vector<1x32xf32>
    %87 = arith.divf %85, %86 : vector<1x32xf32>
    %88 = vector.broadcast %87 : vector<1x32xf32> to vector<8x32xf32>
    %89 = arith.subf %83, %88 : vector<8x32xf32>
    %90 = arith.mulf %89, %89 : vector<8x32xf32>
    %cst_36 = arith.constant dense<0.000000e+00> : vector<32xf32>
    %91 = vector.multi_reduction <add>, %90, %cst_36 [0] : vector<8x32xf32> to vector<32xf32>
    %92 = vector.shape_cast %91 : vector<32xf32> to vector<1x32xf32>
    %cst_37 = arith.constant 8.000000e+00 : f32
    %93 = vector.broadcast %cst_37 : f32 to vector<1x32xf32>
    %94 = arith.divf %92, %93 : vector<1x32xf32>
    %cst_38 = arith.constant 9.99999974E-6 : f32
    %95 = vector.broadcast %cst_38 : f32 to vector<1x32xf32>
    %96 = arith.addf %94, %95 : vector<1x32xf32>
    %97 = math.rsqrt %96 : vector<1x32xf32>
    %98 = arith.mulf %36, %97 : vector<1x32xf32>
    %99 = vector.broadcast %98 : vector<1x32xf32> to vector<8x32xf32>
    %100 = arith.mulf %83, %99 : vector<8x32xf32>
    %101 = arith.mulf %87, %98 : vector<1x32xf32>
    %102 = arith.subf %37, %101 : vector<1x32xf32>
    %103 = vector.broadcast %102 : vector<1x32xf32> to vector<8x32xf32>
    %104 = arith.addf %100, %103 : vector<8x32xf32>
    %cst_39 = arith.constant 1.000000e+00 : f32
    %105 = vector.broadcast %cst_39 : f32 to vector<32x1xf32>
    %cst_40 = arith.constant dense<0.000000e+00> : vector<8x1xf32>
    %106 = tpu.matmul %104, %105, %cst_40 {dimension_numbers = #tpu.dot_dimension_numbers<[1], [0], [0], [1], [0, 0, 1, 1], [], []>} : vector<8x32xf32>, vector<32x1xf32>, vector<8x1xf32> -> vector<8x1xf32>
    %107 = arith.addf %47, %54 : vector<8x1xf32>
    %108 = arith.addf %107, %106 : vector<8x1xf32>
    %109 = arith.addf %108, %2 : vector<8x1xf32>
    %c0_41 = arith.constant 0 : index
    %c0_42 = arith.constant 0 : index
    %110 = vector.load %arg9[%c0_41, %c0_42] : memref<8x1xf32, #tpu.memory_space<vmem>>, vector<8x1xf32>
    tpu.vector_store %arg9[%c0_41, %c0_42], %109 {strides = array<i32>} : memref<8x1xf32, #tpu.memory_space<vmem>>, vector<8x1xf32>,
    return
  }
  func.func @transform_0(%arg0: i32) -> (i32, i32) {
    %c0_i32 = arith.constant 0 : i32
    %c0_i32_0 = arith.constant 0 : i32
    %c0_i32_1 = arith.constant 0 : i32
    return %c0_i32, %c0_i32_0 : i32, i32
  }
  func.func @transform_1(%arg0: i32) -> (i32, i32) {
    %c0_i32 = arith.constant 0 : i32
    %c0_i32_0 = arith.constant 0 : i32
    %c0_i32_1 = arith.constant 0 : i32
    return %c0_i32, %c0_i32_0 : i32, i32
  }
  func.func @transform_2(%arg0: i32) -> (i32, i32) {
    %c0_i32 = arith.constant 0 : i32
    %c0_i32_0 = arith.constant 0 : i32
    %c0_i32_1 = arith.constant 0 : i32
    return %c0_i32, %c0_i32_0 : i32, i32
  }
  func.func @transform_3(%arg0: i32) -> (i32, i32) {
    %c0_i32 = arith.constant 0 : i32
    %c0_i32_0 = arith.constant 0 : i32
    %c0_i32_1 = arith.constant 0 : i32
    return %c0_i32, %c0_i32_0 : i32, i32
  }
  func.func @transform_4(%arg0: i32) -> (i32, i32) {
    %c0_i32 = arith.constant 0 : i32
    %c0_i32_0 = arith.constant 0 : i32
    %c0_i32_1 = arith.constant 0 : i32
    return %c0_i32, %c0_i32_0 : i32, i32
  }
  func.func @transform_5(%arg0: i32) -> (i32, i32) {
    %c0_i32 = arith.constant 0 : i32
    %c0_i32_0 = arith.constant 0 : i32
    %c0_i32_1 = arith.constant 0 : i32
    return %c0_i32, %c0_i32_0 : i32, i32
  }
  func.func @transform_6(%arg0: i32) -> (i32, i32) {
    %c0_i32 = arith.constant 0 : i32
    %c0_i32_0 = arith.constant 0 : i32
    %c0_i32_1 = arith.constant 0 : i32
    return %c0_i32, %c0_i32_0 : i32, i32
  }
  func.func @transform_7(%arg0: i32) -> (i32, i32) {
    %c0_i32 = arith.constant 0 : i32
    %c0_i32_0 = arith.constant 0 : i32
    %c0_i32_1 = arith.constant 0 : i32
    return %c0_i32, %c0_i32_0 : i32, i32
  }
  func.func @transform_8(%arg0: i32) -> (i32, i32) {
    %c0_i32 = arith.constant 0 : i32
    %c0_i32_0 = arith.constant 0 : i32
    %c0_i32_1 = arith.constant 0 : i32
    return %c0_i32, %c0_i32_0 : i32, i32
  }
}

</mosaic_0001>

<llo_original>
// kernel: deepfm_pallas.1
$region0: #{deepfm_pallas.1}
  #allocation0 [shape = 'u32[]', space=smem, size = 0x4, offset = 0x4, fixed_abs, tag = 'smem constant byte address 0x4 - core index']
  #allocation1 [shape = 'u32[144,128]{1,0:T(1,128)}', space=vmem, size = 0x12000, scoped, tag = 'internal scratch']
  %s0 = inlined_call_operand.vmem [shape: f32[8,36], index: 0, kind: input, shape index: {}]
  %s1 = inlined_call_operand.vmem [shape: f32[8,36], index: 1, kind: input, shape index: {}]
  %s2 = inlined_call_operand.vmem [shape: f32[8,1], index: 2, kind: input, shape index: {}]
  %s3 = inlined_call_operand.vmem [shape: f32[64,104], index: 3, kind: input, shape index: {}]
  %s4 = inlined_call_operand.vmem [shape: f32[18,100], index: 4, kind: input, shape index: {}]
  %s5 = inlined_call_operand.vmem [shape: f32[100,40], index: 5, kind: input, shape index: {}]
  %s6 = inlined_call_operand.vmem [shape: f32[144,40], index: 6, kind: input, shape index: {}]
  %s7 = inlined_call_operand.vmem [shape: f32[80,32], index: 7, kind: input, shape index: {}]
  %s8 = inlined_call_operand.vmem [shape: f32[8,1], index: 8, kind: output, shape index: {}]
  %s9 = sld [smem:[#allocation0]]
  $region42: #{deepfm_pallas.1} parent=0
    _
  %s11 = ssub.s32 1, %s9
  %s12 = scalar_select 0, %s11, %s9
  // Predicated region
  $region2: #{deepfm_pallas.1} parent=0 // pred_check
    _
  $region3: #{deepfm_pallas.1} parent=0 // pred_check_branch
    %14 = sbr.rel (0) target = $region5
  $region4: #{deepfm_pallas.1} parent=0 // pred_region
    _
  $region5: #{deepfm_pallas.1} parent=0 // pred_fallthru
    _
  // Predicated region
  $region6: #{deepfm_pallas.1} parent=0 // pred_check
    _
  $region7: #{deepfm_pallas.1} parent=0 // pred_check_branch
    %16 = sbr.rel (0) target = $region9
  $region8: #{deepfm_pallas.1} parent=0 // pred_region
    _
  $region9: #{deepfm_pallas.1} parent=0 // pred_fallthru
    _
  // Predicated region
  $region10: #{deepfm_pallas.1} parent=0 // pred_check
    _
  $region11: #{deepfm_pallas.1} parent=0 // pred_check_branch
    %18 = sbr.rel (0) target = $region13
  $region12: #{deepfm_pallas.1} parent=0 // pred_region
    _
  $region13: #{deepfm_pallas.1} parent=0 // pred_fallthru
    _
  // Predicated region
  $region14: #{deepfm_pallas.1} parent=0 // pred_check
    _
  $region15: #{deepfm_pallas.1} parent=0 // pred_check_branch
    %20 = sbr.rel (0) target = $region17
  $region16: #{deepfm_pallas.1} parent=0 // pred_region
    _
  $region17: #{deepfm_pallas.1} parent=0 // pred_fallthru
    _
  // Predicated region
  $region18: #{deepfm_pallas.1} parent=0 // pred_check
    _
  $region19: #{deepfm_pallas.1} parent=0 // pred_check_branch
    %22 = sbr.rel (0) target = $region21
  $region20: #{deepfm_pallas.1} parent=0 // pred_region
    _
  $region21: #{deepfm_pallas.1} parent=0 // pred_fallthru
    _
  // Predicated region
  $region22: #{deepfm_pallas.1} parent=0 // pred_check
    _
  $region23: #{deepfm_pallas.1} parent=0 // pred_check_branch
    %24 = sbr.rel (0) target = $region25
  $region24: #{deepfm_pallas.1} parent=0 // pred_region
    _
  $region25: #{deepfm_pallas.1} parent=0 // pred_fallthru
    _
  // Predicated region
  $region26: #{deepfm_pallas.1} parent=0 // pred_check
    _
  $region27: #{deepfm_pallas.1} parent=0 // pred_check_branch
    %26 = sbr.rel (0) target = $region29
  $region28: #{deepfm_pallas.1} parent=0 // pred_region
    _
  $region29: #{deepfm_pallas.1} parent=0 // pred_fallthru
    _
  // Predicated region
  $region30: #{deepfm_pallas.1} parent=0 // pred_check
    _
  $region31: #{deepfm_pallas.1} parent=0 // pred_check_branch
    %28 = sbr.rel (0) target = $region33
  $region32: #{deepfm_pallas.1} parent=0 // pred_region
    _
  $region33: #{deepfm_pallas.1} parent=0 // pred_fallthru
    _
  %v29 = vld [vmem:[%s0] sm:$0xff]
  %v30 = vld [vmem:[%s1] sm:$0xff]
  %v31 = vld [vmem:[%s2] sm:$0xff]
  %v32 = vld [vmem:[%s3] sm:$0xff]
  %v33 = vld [vmem:[%s3 + $0x8] sm:$0xff]
  %v34 = vld [vmem:[%s3 + $0x10] sm:$0xff]
  %v35 = vld [vmem:[%s3 + $0x18] sm:$0xff]
  %v36 = vld [vmem:[%s3 + $0x20] sm:$0xff]
  %v37 = vld [vmem:[%s3 + $0x28] sm:$0xff]
  %v38 = vld [vmem:[%s3 + $0x30] sm:$0xff]
  %v39 = vld [vmem:[%s3 + $0x38] sm:$0xff]
  %v40 = vld [vmem:[%s4] sm:$0xff]
  %v41 = vld [vmem:[%s4 + $0x8] sm:$0xff]
  %v42 = vld [vmem:[%s4 + $0x10] sm:$0x3]
  %v43 = vld [vmem:[%s5] sm:$0xff]
  %v44 = vld [vmem:[%s5 + $0x8] sm:$0xff]
  %v45 = vld [vmem:[%s5 + $0x10] sm:$0xff]
  %v46 = vld [vmem:[%s5 + $0x18] sm:$0xff]
  %v47 = vld [vmem:[%s5 + $0x20] sm:$0xff]
  %v48 = vld [vmem:[%s5 + $0x28] sm:$0xff]
  %v49 = vld [vmem:[%s5 + $0x30] sm:$0xff]
  %v50 = vld [vmem:[%s5 + $0x38] sm:$0xff]
  %v51 = vld [vmem:[%s5 + $0x40] sm:$0xff]
  %v52 = vld [vmem:[%s5 + $0x48] sm:$0xff]
  %v53 = vld [vmem:[%s5 + $0x50] sm:$0xff]
  %v54 = vld [vmem:[%s5 + $0x58] sm:$0xff]
  %v55 = vld [vmem:[%s5 + $0x60] sm:$0xf]
  %v56 = vld [vmem:[%s6] sm:$0xff]
  %v57 = vld [vmem:[%s6 + $0x8] sm:$0xff]
  %v58 = vld [vmem:[%s6 + $0x10] sm:$0xff]
  %v59 = vld [vmem:[%s6 + $0x18] sm:$0xff]
  %v60 = vld [vmem:[%s6 + $0x20] sm:$0xff]
  %v61 = vld [vmem:[%s6 + $0x28] sm:$0xff]
  %v62 = vld [vmem:[%s6 + $0x30] sm:$0xff]
  %v63 = vld [vmem:[%s6 + $0x38] sm:$0xff]
  %v64 = vld [vmem:[%s6 + $0x40] sm:$0xff]
  %v65 = vld [vmem:[%s6 + $0x48] sm:$0xff]
  %v66 = vld [vmem:[%s6 + $0x50] sm:$0xff]
  %v67 = vld [vmem:[%s6 + $0x58] sm:$0xff]
  %v68 = vld [vmem:[%s6 + $0x60] sm:$0xff]
  %v69 = vld [vmem:[%s6 + $0x68] sm:$0xff]
  %v70 = vld [vmem:[%s6 + $0x70] sm:$0xff]
  %v71 = vld [vmem:[%s6 + $0x78] sm:$0xff]
  %v72 = vld [vmem:[%s6 + $0x80] sm:$0xff]
  %v73 = vld [vmem:[%s6 + $0x88] sm:$0xff]
  %v74 = vld [vmem:[%s7] sm:$0xff]
  %v75 = vld [vmem:[%s7 + $0x8] sm:$0xff]
  %v76 = vld [vmem:[%s7 + $0x10] sm:$0xff]
  %v77 = vld [vmem:[%s7 + $0x18] sm:$0xff]
  %v78 = vld [vmem:[%s7 + $0x20] sm:$0xff]
  %v79 = vld [vmem:[%s7 + $0x28] sm:$0xff]
  %v80 = vld [vmem:[%s7 + $0x30] sm:$0xff]
  %v81 = vld [vmem:[%s7 + $0x38] sm:$0xff]
  %v82 = vld [vmem:[%s7 + $0x40] sm:$0xff]
  %v83 = vld [vmem:[%s7 + $0x48] sm:$0xff]
  %v84 = vmul.f32 %v30, %v29
  %vm85 = vcmask 211968
  %v87 = vsel %vm85, %v30, 0
  %vm89 = vcmask 1041408
  %v91 = vsel %vm89, %v39, 0
  %93 = vmatprep.subr.mxu0 0.0
  %94 = vmatpush1.msra.mxu0 %v36
  %95 = vmatprep.subr.mxu0 0.0
  %96 = vmatpush1.msra.mxu0 %v37
  %97 = vmatprep.subr.mxu0 0.0
  %98 = vmatpush1.msra.mxu0 %v38
  %99 = vmatprep.subr.mxu0 0.0
  %100 = vmatpush1.msra.mxu0 %v91
  %101 = vmatprep.subr.mxu0 0.0
  %102 = vmatpush1.msra.mxu0 0.0
  %103 = vmatprep.subr.mxu0 0.0
  %104 = vmatpush1.msra.mxu0 0.0
  %105 = vmatprep.subr.mxu0 0.0
  %106 = vmatpush1.msra.mxu0 0.0
  %107 = vmatprep.subr.mxu0 0.0
  %108 = vmatpush1.msra.mxu0 0.0
  %109 = vmatprep.subr.mxu0 0.0
  %110 = vmatpush1.msra.mxu0 0.0
  %111 = vmatprep.subr.mxu0 0.0
  %112 = vmatpush1.msra.mxu0 0.0
  %113 = vmatprep.subr.mxu0 0.0
  %114 = vmatpush1.msra.mxu0 0.0
  %115 = vmatprep.subr.mxu0 0.0
  %116 = vmatpush1.msra.mxu0 0.0
  %117 = vmatprep.subr.mxu0 0.0
  %118 = vmatpush1.msra.mxu0 0.0
  %119 = vmatprep.subr.mxu0 0.0
  %120 = vmatpush1.msra.mxu0 0.0
  %121 = vmatprep.subr.mxu0 0.0
  %122 = vmatpush1.msra.mxu0 0.0
  %123 = vmatprep.subr.mxu0 0.0
  %124 = vmatpush1.msra.mxu0 0.0
  %125 = vmatprep.subr.mxu0 0.0
  %126 = vmatpush1.msra.mxu0 0.0
  %127 = vmatprep.subr.mxu0 0.0
  %128 = vmatpush1.msra.mxu0 0.0
  %129 = vmatprep.subr.mxu0 0.0
  %130 = vmatpush1.msra.mxu0 0.0
  %131 = vmatprep.subr.mxu0 0.0
  %132 = vmatpush1.msra.mxu0 0.0
  %133 = vmatprep.subr.mxu0 0.0
  %134 = vmatpush1.msra.mxu0 0.0
  %135 = vmatprep.subr.mxu0 0.0
  %136 = vmatpush1.msra.mxu0 0.0
  %137 = vmatprep.subr.mxu0 0.0
  %138 = vmatpush1.msra.mxu0 0.0
  %139 = vmatprep.subr.mxu0 0.0
  %140 = vmatpush1.msra.mxu0 0.0
  %141 = vmatprep.subr.mxu0 0.0
  %142 = vmatpush1.msra.mxu0 0.0
  %143 = vmatprep.subr.mxu0 0.0
  %144 = vmatpush1.msra.mxu0 0.0
  %145 = vmatprep.subr.mxu0 0.0
  %146 = vmatpush1.msra.mxu0 0.0
  %147 = vmatprep.subr.mxu0 0.0
  %148 = vmatpush1.msra.mxu0 0.0
  %149 = vmatprep.subr.mxu0 0.0
  %150 = vmatpush1.msra.mxu0 0.0
  %151 = vmatprep.subr.mxu0 0.0
  %152 = vmatpush1.msra.mxu0 0.0
  %153 = vmatprep.subr.mxu0 0.0
  %154 = vmatpush1.msra.mxu0 0.0
  %155 = vmatprep.subr.mxu0 0.0
  %156 = vmatpush1.msra.mxu0 0.0
  %157 = vmatprep.mubr.f32.mxu0 0.0
  %158 = vmatmul.mubr.f32.gmra.mrb[0].mxu0 %v87
  %v159 = vpop.f32.mrb[0].mxu0
  %v160 = vadd.f32 0.0, %v159
  %v161 = vpop.f32.mrb[0].mxu0
  %162 = vdwg.mxu0
  %v164 = vsel %vm85, %v84, 0
  %v167 = vsel %vm89, %v35, 0
  %169 = vmatprep.subr.mxu0 0.0
  %170 = vmatpush1.msra.mxu0 %v32
  %171 = vmatprep.subr.mxu0 0.0
  %172 = vmatpush1.msra.mxu0 %v33
  %173 = vmatprep.subr.mxu0 0.0
  %174 = vmatpush1.msra.mxu0 %v34
  %175 = vmatprep.subr.mxu0 0.0
  %176 = vmatpush1.msra.mxu0 %v167
  %177 = vmatprep.subr.mxu0 0.0
  %178 = vmatpush1.msra.mxu0 0.0
  %179 = vmatprep.subr.mxu0 0.0
  %180 = vmatpush1.msra.mxu0 0.0
  %181 = vmatprep.subr.mxu0 0.0
  %182 = vmatpush1.msra.mxu0 0.0
  %183 = vmatprep.subr.mxu0 0.0
  %184 = vmatpush1.msra.mxu0 0.0
  %185 = vmatprep.subr.mxu0 0.0
  %186 = vmatpush1.msra.mxu0 0.0
  %187 = vmatprep.subr.mxu0 0.0
  %188 = vmatpush1.msra.mxu0 0.0
  %189 = vmatprep.subr.mxu0 0.0
  %190 = vmatpush1.msra.mxu0 0.0
  %191 = vmatprep.subr.mxu0 0.0
  %192 = vmatpush1.msra.mxu0 0.0
  %193 = vmatprep.subr.mxu0 0.0
  %194 = vmatpush1.msra.mxu0 0.0
  %195 = vmatprep.subr.mxu0 0.0
  %196 = vmatpush1.msra.mxu0 0.0
  %197 = vmatprep.subr.mxu0 0.0
  %198 = vmatpush1.msra.mxu0 0.0
  %199 = vmatprep.subr.mxu0 0.0
  %200 = vmatpush1.msra.mxu0 0.0
  %201 = vmatprep.subr.mxu0 0.0
  %202 = vmatpush1.msra.mxu0 0.0
  %203 = vmatprep.subr.mxu0 0.0
  %204 = vmatpush1.msra.mxu0 0.0
  %205 = vmatprep.subr.mxu0 0.0
  %206 = vmatpush1.msra.mxu0 0.0
  %207 = vmatprep.subr.mxu0 0.0
  %208 = vmatpush1.msra.mxu0 0.0
  %209 = vmatprep.subr.mxu0 0.0
  %210 = vmatpush1.msra.mxu0 0.0
  %211 = vmatprep.subr.mxu0 0.0
  %212 = vmatpush1.msra.mxu0 0.0
  %213 = vmatprep.subr.mxu0 0.0
  %214 = vmatpush1.msra.mxu0 0.0
  %215 = vmatprep.subr.mxu0 0.0
  %216 = vmatpush1.msra.mxu0 0.0
  %217 = vmatprep.subr.mxu0 0.0
  %218 = vmatpush1.msra.mxu0 0.0
  %219 = vmatprep.subr.mxu0 0.0
  %220 = vmatpush1.msra.mxu0 0.0
  %221 = vmatprep.subr.mxu0 0.0
  %222 = vmatpush1.msra.mxu0 0.0
  %223 = vmatprep.subr.mxu0 0.0
  %224 = vmatpush1.msra.mxu0 0.0
  %225 = vmatprep.subr.mxu0 0.0
  %226 = vmatpush1.msra.mxu0 0.0
  %227 = vmatprep.subr.mxu0 0.0
  %228 = vmatpush1.msra.mxu0 0.0
  %229 = vmatprep.subr.mxu0 0.0
  %230 = vmatpush1.msra.mxu0 0.0
  %231 = vmatprep.subr.mxu0 0.0
  %232 = vmatpush1.msra.mxu0 0.0
  %233 = vmatprep.mubr.f32.mxu0 0.0
  %234 = vmatmul.mubr.f32.gmra.mrb[0].mxu0 %v164
  %v235 = vpop.f32.mrb[0].mxu0
  %v236 = vadd.f32 %v160, %v235
  %v237 = vpop.f32.mrb[0].mxu0
  %238 = vdwg.mxu0
  %240 = vrot.lane.b32.xlu0 %v29, 102
  %v241 = vpop.permute.xlu0 %240
  %vm242 = vcmask 80896
  %v243 = vsel %vm242, %v241, 0
  %v246 = vsel %vm89, %v42, 0
  %248 = vmatprep.subr.mxu0 0.0
  %249 = vmatpush1.msra.mxu0 %v41
  %250 = vmatprep.subr.mxu0 0.0
  %251 = vmatpush1.msra.mxu0 %v246
  %252 = vmatprep.subr.mxu0 0.0
  %253 = vmatpush1.msra.mxu0 0.0
  %254 = vmatprep.subr.mxu0 0.0
  %255 = vmatpush1.msra.mxu0 0.0
  %256 = vmatprep.subr.mxu0 0.0
  %257 = vmatpush1.msra.mxu0 0.0
  %258 = vmatprep.subr.mxu0 0.0
  %259 = vmatpush1.msra.mxu0 0.0
  %260 = vmatprep.subr.mxu0 0.0
  %261 = vmatpush1.msra.mxu0 0.0
  %262 = vmatprep.subr.mxu0 0.0
  %263 = vmatpush1.msra.mxu0 0.0
  %264 = vmatprep.subr.mxu0 0.0
  %265 = vmatpush1.msra.mxu0 0.0
  %266 = vmatprep.subr.mxu0 0.0
  %267 = vmatpush1.msra.mxu0 0.0
  %268 = vmatprep.subr.mxu0 0.0
  %269 = vmatpush1.msra.mxu0 0.0
  %270 = vmatprep.subr.mxu0 0.0
  %271 = vmatpush1.msra.mxu0 0.0
  %272 = vmatprep.subr.mxu0 0.0
  %273 = vmatpush1.msra.mxu0 0.0
  %274 = vmatprep.subr.mxu0 0.0
  %275 = vmatpush1.msra.mxu0 0.0
  %276 = vmatprep.subr.mxu0 0.0
  %277 = vmatpush1.msra.mxu0 0.0
  %278 = vmatprep.subr.mxu0 0.0
  %279 = vmatpush1.msra.mxu0 0.0
  %280 = vmatprep.subr.mxu0 0.0
  %281 = vmatpush1.msra.mxu0 0.0
  %282 = vmatprep.subr.mxu0 0.0
  %283 = vmatpush1.msra.mxu0 0.0
  %284 = vmatprep.subr.mxu0 0.0
  %285 = vmatpush1.msra.mxu0 0.0
  %286 = vmatprep.subr.mxu0 0.0
  %287 = vmatpush1.msra.mxu0 0.0
  %288 = vmatprep.subr.mxu0 0.0
  %289 = vmatpush1.msra.mxu0 0.0
  %290 = vmatprep.subr.mxu0 0.0
  %291 = vmatpush1.msra.mxu0 0.0
  %292 = vmatprep.subr.mxu0 0.0
  %293 = vmatpush1.msra.mxu0 0.0
  %294 = vmatprep.subr.mxu0 0.0
  %295 = vmatpush1.msra.mxu0 0.0
  %296 = vmatprep.subr.mxu0 0.0
  %297 = vmatpush1.msra.mxu0 0.0
  %298 = vmatprep.subr.mxu0 0.0
  %299 = vmatpush1.msra.mxu0 0.0
  %300 = vmatprep.subr.mxu0 0.0
  %301 = vmatpush1.msra.mxu0 0.0
  %302 = vmatprep.subr.mxu0 0.0
  %303 = vmatpush1.msra.mxu0 0.0
  %304 = vmatprep.subr.mxu0 0.0
  %305 = vmatpush1.msra.mxu0 0.0
  %306 = vmatprep.subr.mxu0 0.0
  %307 = vmatpush1.msra.mxu0 0.0
  %308 = vmatprep.subr.mxu0 0.0
  %309 = vmatpush1.msra.mxu0 0.0
  %310 = vmatprep.subr.mxu0 0.0
  %311 = vmatpush1.msra.mxu0 0.0
  %312 = vmatprep.mubr.f32.mxu0 0.0
  %313 = vmatmul.mubr.f32.gmra.mrb[0].mxu0 %v243
  %v314 = vpop.f32.mrb[0].mxu0
  %v315 = vadd.f32 0.0, %v314
  %v316 = vpop.f32.mrb[0].mxu0
  %317 = vdwg.mxu0
  %318 = vrot.lane.b32.xlu0 %v30, 102
  %v319 = vpop.permute.xlu0 %318
  %v320 = vsel %vm242, %v319, 0
  %322 = vmatprep.subr.mxu0 0.0
  %323 = vmatpush1.msra.mxu0 %v41
  %324 = vmatprep.subr.mxu0 0.0
  %325 = vmatpush1.msra.mxu0 %v246
  %326 = vmatprep.subr.mxu0 0.0
  %327 = vmatpush1.msra.mxu0 0.0
  %328 = vmatprep.subr.mxu0 0.0
  %329 = vmatpush1.msra.mxu0 0.0
  %330 = vmatprep.subr.mxu0 0.0
  %331 = vmatpush1.msra.mxu0 0.0
  %332 = vmatprep.subr.mxu0 0.0
  %333 = vmatpush1.msra.mxu0 0.0
  %334 = vmatprep.subr.mxu0 0.0
  %335 = vmatpush1.msra.mxu0 0.0
  %336 = vmatprep.subr.mxu0 0.0
  %337 = vmatpush1.msra.mxu0 0.0
  %338 = vmatprep.subr.mxu0 0.0
  %339 = vmatpush1.msra.mxu0 0.0
  %340 = vmatprep.subr.mxu0 0.0
  %341 = vmatpush1.msra.mxu0 0.0
  %342 = vmatprep.subr.mxu0 0.0
  %343 = vmatpush1.msra.mxu0 0.0
  %344 = vmatprep.subr.mxu0 0.0
  %345 = vmatpush1.msra.mxu0 0.0
  %346 = vmatprep.subr.mxu0 0.0
  %347 = vmatpush1.msra.mxu0 0.0
  %348 = vmatprep.subr.mxu0 0.0
  %349 = vmatpush1.msra.mxu0 0.0
  %350 = vmatprep.subr.mxu0 0.0
  %351 = vmatpush1.msra.mxu0 0.0
  %352 = vmatprep.subr.mxu0 0.0
  %353 = vmatpush1.msra.mxu0 0.0
  %354 = vmatprep.subr.mxu0 0.0
  %355 = vmatpush1.msra.mxu0 0.0
  %356 = vmatprep.subr.mxu0 0.0
  %357 = vmatpush1.msra.mxu0 0.0
  %358 = vmatprep.subr.mxu0 0.0
  %359 = vmatpush1.msra.mxu0 0.0
  %360 = vmatprep.subr.mxu0 0.0
  %361 = vmatpush1.msra.mxu0 0.0
  %362 = vmatprep.subr.mxu0 0.0
  %363 = vmatpush1.msra.mxu0 0.0
  %364 = vmatprep.subr.mxu0 0.0
  %365 = vmatpush1.msra.mxu0 0.0
  %366 = vmatprep.subr.mxu0 0.0
  %367 = vmatpush1.msra.mxu0 0.0
  %368 = vmatprep.subr.mxu0 0.0
  %369 = vmatpush1.msra.mxu0 0.0
  %370 = vmatprep.subr.mxu0 0.0
  %371 = vmatpush1.msra.mxu0 0.0
  %372 = vmatprep.subr.mxu0 0.0
  %373 = vmatpush1.msra.mxu0 0.0
  %374 = vmatprep.subr.mxu0 0.0
  %375 = vmatpush1.msra.mxu0 0.0
  %376 = vmatprep.subr.mxu0 0.0
  %377 = vmatpush1.msra.mxu0 0.0
  %378 = vmatprep.subr.mxu0 0.0
  %379 = vmatpush1.msra.mxu0 0.0
  %380 = vmatprep.subr.mxu0 0.0
  %381 = vmatpush1.msra.mxu0 0.0
  %382 = vmatprep.subr.mxu0 0.0
  %383 = vmatpush1.msra.mxu0 0.0
  %384 = vmatprep.subr.mxu0 0.0
  %385 = vmatpush1.msra.mxu0 0.0
  %386 = vmatprep.mubr.f32.mxu0 0.0
  %387 = vmatmul.mubr.f32.gmra.mrb[0].mxu0 %v320
  %v388 = vpop.f32.mrb[0].mxu0
  %v389 = vadd.f32 0.0, %v388
  %v390 = vpop.f32.mrb[0].mxu0
  %391 = vdwg.mxu0
  %v392 = vlaneseq
  %v393 = vshrl.u32 %v392, 7
  %v394 = vsub.s32 0, %v393
  %v395 = vrot.slane %v40, %v394
  %vm396 = vcmp.eq.f32.partialorder %v315, %v395
  %v397 = vsel %vm396, %v389, 0.0
  %vm398 = vcmask 818176
  %v400 = vsel %vm398, %v397, 0
  %vm402 = vcmask 1043456
  %v404 = vsel %vm402, %v55, 0
  %406 = vmatprep.subr.mxu0 0.0
  %407 = vmatpush1.msra.mxu0 %v43
  %408 = vmatprep.subr.mxu0 0.0
  %409 = vmatpush1.msra.mxu0 %v44
  %410 = vmatprep.subr.mxu0 0.0
  %411 = vmatpush1.msra.mxu0 %v45
  %412 = vmatprep.subr.mxu0 0.0
  %413 = vmatpush1.msra.mxu0 %v46
  %414 = vmatprep.subr.mxu0 0.0
  %415 = vmatpush1.msra.mxu0 %v47
  %416 = vmatprep.subr.mxu0 0.0
  %417 = vmatpush1.msra.mxu0 %v48
  %418 = vmatprep.subr.mxu0 0.0
  %419 = vmatpush1.msra.mxu0 %v49
  %420 = vmatprep.subr.mxu0 0.0
  %421 = vmatpush1.msra.mxu0 %v50
  %422 = vmatprep.subr.mxu0 0.0
  %423 = vmatpush1.msra.mxu0 %v51
  %424 = vmatprep.subr.mxu0 0.0
  %425 = vmatpush1.msra.mxu0 %v52
  %426 = vmatprep.subr.mxu0 0.0
  %427 = vmatpush1.msra.mxu0 %v53
  %428 = vmatprep.subr.mxu0 0.0
  %429 = vmatpush1.msra.mxu0 %v54
  %430 = vmatprep.subr.mxu0 0.0
  %431 = vmatpush1.msra.mxu0 %v404
  %432 = vmatprep.subr.mxu0 0.0
  %433 = vmatpush1.msra.mxu0 0.0
  %434 = vmatprep.subr.mxu0 0.0
  %435 = vmatpush1.msra.mxu0 0.0
  %436 = vmatprep.subr.mxu0 0.0
  %437 = vmatpush1.msra.mxu0 0.0
  %438 = vmatprep.subr.mxu0 0.0
  %439 = vmatpush1.msra.mxu0 0.0
  %440 = vmatprep.subr.mxu0 0.0
  %441 = vmatpush1.msra.mxu0 0.0
  %442 = vmatprep.subr.mxu0 0.0
  %443 = vmatpush1.msra.mxu0 0.0
  %444 = vmatprep.subr.mxu0 0.0
  %445 = vmatpush1.msra.mxu0 0.0
  %446 = vmatprep.subr.mxu0 0.0
  %447 = vmatpush1.msra.mxu0 0.0
  %448 = vmatprep.subr.mxu0 0.0
  %449 = vmatpush1.msra.mxu0 0.0
  %450 = vmatprep.subr.mxu0 0.0
  %451 = vmatpush1.msra.mxu0 0.0
  %452 = vmatprep.subr.mxu0 0.0
  %453 = vmatpush1.msra.mxu0 0.0
  %454 = vmatprep.subr.mxu0 0.0
  %455 = vmatpush1.msra.mxu0 0.0
  %456 = vmatprep.subr.mxu0 0.0
  %457 = vmatpush1.msra.mxu0 0.0
  %458 = vmatprep.subr.mxu0 0.0
  %459 = vmatpush1.msra.mxu0 0.0
  %460 = vmatprep.subr.mxu0 0.0
  %461 = vmatpush1.msra.mxu0 0.0
  %462 = vmatprep.subr.mxu0 0.0
  %463 = vmatpush1.msra.mxu0 0.0
  %464 = vmatprep.subr.mxu0 0.0
  %465 = vmatpush1.msra.mxu0 0.0
  %466 = vmatprep.subr.mxu0 0.0
  %467 = vmatpush1.msra.mxu0 0.0
  %468 = vmatprep.subr.mxu0 0.0
  %469 = vmatpush1.msra.mxu0 0.0
  %470 = vmatprep.mubr.f32.mxu0 0.0
  %471 = vmatmul.mubr.f32.gmra.mrb[0].mxu0 %v400
  %v472 = vpop.f32.mrb[0].mxu0
  %v473 = vadd.f32 0.0, %v472
  %v474 = vpop.f32.mrb[0].mxu0
  %475 = vdwg.mxu0
  %481 = vrot.lane.b32.xlu0 %v69, 96
  %v482 = vpop.permute.xlu0 %481
  %483 = vrot.lane.b32.xlu0 %v70, 96
  %v484 = vpop.permute.xlu0 %483
  %485 = vrot.lane.b32.xlu0 %v71, 96
  %v486 = vpop.permute.xlu0 %485
  %487 = vrot.lane.b32.xlu0 %v72, 96
  %v488 = vpop.permute.xlu0 %487
  %489 = vrot.lane.b32.xlu0 %v73, 96
  %v490 = vpop.permute.xlu0 %489
  %vm496 = vcmask 326656
  %v498 = vsel %vm496, %v473, 0
  %500 = vmatprep.subr.mxu0 0.0
  %501 = vmatpush1.msra.mxu0 %v482
  %502 = vmatprep.subr.mxu0 0.0
  %503 = vmatpush1.msra.mxu0 %v484
  %504 = vmatprep.subr.mxu0 0.0
  %505 = vmatpush1.msra.mxu0 %v486
  %506 = vmatprep.subr.mxu0 0.0
  %507 = vmatpush1.msra.mxu0 %v488
  %508 = vmatprep.subr.mxu0 0.0
  %509 = vmatpush1.msra.mxu0 %v490
  %510 = vmatprep.subr.mxu0 0.0
  %511 = vmatpush1.msra.mxu0 0.0
  %512 = vmatprep.subr.mxu0 0.0
  %513 = vmatpush1.msra.mxu0 0.0
  %514 = vmatprep.subr.mxu0 0.0
  %515 = vmatpush1.msra.mxu0 0.0
  %516 = vmatprep.subr.mxu0 0.0
  %517 = vmatpush1.msra.mxu0 0.0
  %518 = vmatprep.subr.mxu0 0.0
  %519 = vmatpush1.msra.mxu0 0.0
  %520 = vmatprep.subr.mxu0 0.0
  %521 = vmatpush1.msra.mxu0 0.0
  %522 = vmatprep.subr.mxu0 0.0
  %523 = vmatpush1.msra.mxu0 0.0
  %524 = vmatprep.subr.mxu0 0.0
  %525 = vmatpush1.msra.mxu0 0.0
  %526 = vmatprep.subr.mxu0 0.0
  %527 = vmatpush1.msra.mxu0 0.0
  %528 = vmatprep.subr.mxu0 0.0
  %529 = vmatpush1.msra.mxu0 0.0
  %530 = vmatprep.subr.mxu0 0.0
  %531 = vmatpush1.msra.mxu0 0.0
  %532 = vmatprep.subr.mxu0 0.0
  %533 = vmatpush1.msra.mxu0 0.0
  %534 = vmatprep.subr.mxu0 0.0
  %535 = vmatpush1.msra.mxu0 0.0
  %536 = vmatprep.subr.mxu0 0.0
  %537 = vmatpush1.msra.mxu0 0.0
  %538 = vmatprep.subr.mxu0 0.0
  %539 = vmatpush1.msra.mxu0 0.0
  %540 = vmatprep.subr.mxu0 0.0
  %541 = vmatpush1.msra.mxu0 0.0
  %542 = vmatprep.subr.mxu0 0.0
  %543 = vmatpush1.msra.mxu0 0.0
  %544 = vmatprep.subr.mxu0 0.0
  %545 = vmatpush1.msra.mxu0 0.0
  %546 = vmatprep.subr.mxu0 0.0
  %547 = vmatpush1.msra.mxu0 0.0
  %548 = vmatprep.subr.mxu0 0.0
  %549 = vmatpush1.msra.mxu0 0.0
  %550 = vmatprep.subr.mxu0 0.0
  %551 = vmatpush1.msra.mxu0 0.0
  %552 = vmatprep.subr.mxu0 0.0
  %553 = vmatpush1.msra.mxu0 0.0
  %554 = vmatprep.subr.mxu0 0.0
  %555 = vmatpush1.msra.mxu0 0.0
  %556 = vmatprep.subr.mxu0 0.0
  %557 = vmatpush1.msra.mxu0 0.0
  %558 = vmatprep.subr.mxu0 0.0
  %559 = vmatpush1.msra.mxu0 0.0
  %560 = vmatprep.subr.mxu0 0.0
  %561 = vmatpush1.msra.mxu0 0.0
  %562 = vmatprep.subr.mxu0 0.0
  %563 = vmatpush1.msra.mxu0 0.0
  %564 = vmatprep.mubr.f32.mxu0 0.0
  %565 = vmatmul.mubr.f32.gmra.mrb[0].mxu0 %v498
  %v566 = vpop.f32.mrb[0].mxu0
  %v567 = vadd.f32 0.0, %v566
  %v568 = vpop.f32.mrb[0].mxu0
  %569 = vdwg.mxu0
  %583 = vrot.lane.b32.xlu0 %v56, 96
  %v584 = vpop.permute.xlu0 %583
  %585 = vrot.lane.b32.xlu0 %v57, 96
  %v586 = vpop.permute.xlu0 %585
  %587 = vrot.lane.b32.xlu0 %v58, 96
  %v588 = vpop.permute.xlu0 %587
  %589 = vrot.lane.b32.xlu0 %v59, 96
  %v590 = vpop.permute.xlu0 %589
  %591 = vrot.lane.b32.xlu0 %v60, 96
  %v592 = vpop.permute.xlu0 %591
  %593 = vrot.lane.b32.xlu0 %v61, 96
  %v594 = vpop.permute.xlu0 %593
  %595 = vrot.lane.b32.xlu0 %v62, 96
  %v596 = vpop.permute.xlu0 %595
  %597 = vrot.lane.b32.xlu0 %v63, 96
  %v598 = vpop.permute.xlu0 %597
  %599 = vrot.lane.b32.xlu0 %v64, 96
  %v600 = vpop.permute.xlu0 %599
  %601 = vrot.lane.b32.xlu0 %v65, 96
  %v602 = vpop.permute.xlu0 %601
  %603 = vrot.lane.b32.xlu0 %v66, 96
  %v604 = vpop.permute.xlu0 %603
  %605 = vrot.lane.b32.xlu0 %v67, 96
  %v606 = vpop.permute.xlu0 %605
  %607 = vrot.lane.b32.xlu0 %v68, 96
  %v608 = vpop.permute.xlu0 %607
  %vm622 = vcmask 850944
  %v624 = vsel %vm622, %v236, 0
  %626 = vmatprep.subr.mxu0 0.0
  %627 = vmatpush1.msra.mxu0 %v584
  %628 = vmatprep.subr.mxu0 0.0
  %629 = vmatpush1.msra.mxu0 %v586
  %630 = vmatprep.subr.mxu0 0.0
  %631 = vmatpush1.msra.mxu0 %v588
  %632 = vmatprep.subr.mxu0 0.0
  %633 = vmatpush1.msra.mxu0 %v590
  %634 = vmatprep.subr.mxu0 0.0
  %635 = vmatpush1.msra.mxu0 %v592
  %636 = vmatprep.subr.mxu0 0.0
  %637 = vmatpush1.msra.mxu0 %v594
  %638 = vmatprep.subr.mxu0 0.0
  %639 = vmatpush1.msra.mxu0 %v596
  %640 = vmatprep.subr.mxu0 0.0
  %641 = vmatpush1.msra.mxu0 %v598
  %642 = vmatprep.subr.mxu0 0.0
  %643 = vmatpush1.msra.mxu0 %v600
  %644 = vmatprep.subr.mxu0 0.0
  %645 = vmatpush1.msra.mxu0 %v602
  %646 = vmatprep.subr.mxu0 0.0
  %647 = vmatpush1.msra.mxu0 %v604
  %648 = vmatprep.subr.mxu0 0.0
  %649 = vmatpush1.msra.mxu0 %v606
  %650 = vmatprep.subr.mxu0 0.0
  %651 = vmatpush1.msra.mxu0 %v608
  %652 = vmatprep.subr.mxu0 0.0
  %653 = vmatpush1.msra.mxu0 0.0
  %654 = vmatprep.subr.mxu0 0.0
  %655 = vmatpush1.msra.mxu0 0.0
  %656 = vmatprep.subr.mxu0 0.0
  %657 = vmatpush1.msra.mxu0 0.0
  %658 = vmatprep.subr.mxu0 0.0
  %659 = vmatpush1.msra.mxu0 0.0
  %660 = vmatprep.subr.mxu0 0.0
  %661 = vmatpush1.msra.mxu0 0.0
  %662 = vmatprep.subr.mxu0 0.0
  %663 = vmatpush1.msra.mxu0 0.0
  %664 = vmatprep.subr.mxu0 0.0
  %665 = vmatpush1.msra.mxu0 0.0
  %666 = vmatprep.subr.mxu0 0.0
  %667 = vmatpush1.msra.mxu0 0.0
  %668 = vmatprep.subr.mxu0 0.0
  %669 = vmatpush1.msra.mxu0 0.0
  %670 = vmatprep.subr.mxu0 0.0
  %671 = vmatpush1.msra.mxu0 0.0
  %672 = vmatprep.subr.mxu0 0.0
  %673 = vmatpush1.msra.mxu0 0.0
  %674 = vmatprep.subr.mxu0 0.0
  %675 = vmatpush1.msra.mxu0 0.0
  %676 = vmatprep.subr.mxu0 0.0
  %677 = vmatpush1.msra.mxu0 0.0
  %678 = vmatprep.subr.mxu0 0.0
  %679 = vmatpush1.msra.mxu0 0.0
  %680 = vmatprep.subr.mxu0 0.0
  %681 = vmatpush1.msra.mxu0 0.0
  %682 = vmatprep.subr.mxu0 0.0
  %683 = vmatpush1.msra.mxu0 0.0
  %684 = vmatprep.subr.mxu0 0.0
  %685 = vmatpush1.msra.mxu0 0.0
  %686 = vmatprep.subr.mxu0 0.0
  %687 = vmatpush1.msra.mxu0 0.0
  %688 = vmatprep.subr.mxu0 0.0
  %689 = vmatpush1.msra.mxu0 0.0
  %690 = vmatprep.mubr.f32.mxu0 0.0
  %691 = vmatmul.mubr.f32.gmra.mrb[0].mxu0 %v624
  %v692 = vpop.f32.mrb[0].mxu0
  %v693 = vadd.f32 %v567, %v692
  %v694 = vpop.f32.mrb[0].mxu0
  %695 = vdwg.mxu0
  %v696 = vmul.f32 %v236, %v236
  %v697 = vmul.f32 %v473, %v473
  %v699 = vsel %vm496, %v697, 0
  %701 = vmatprep.subr.mxu0 0.0
  %702 = vmatpush1.msra.mxu0 %v482
  %703 = vmatprep.subr.mxu0 0.0
  %704 = vmatpush1.msra.mxu0 %v484
  %705 = vmatprep.subr.mxu0 0.0
  %706 = vmatpush1.msra.mxu0 %v486
  %707 = vmatprep.subr.mxu0 0.0
  %708 = vmatpush1.msra.mxu0 %v488
  %709 = vmatprep.subr.mxu0 0.0
  %710 = vmatpush1.msra.mxu0 %v490
  %711 = vmatprep.subr.mxu0 0.0
  %712 = vmatpush1.msra.mxu0 0.0
  %713 = vmatprep.subr.mxu0 0.0
  %714 = vmatpush1.msra.mxu0 0.0
  %715 = vmatprep.subr.mxu0 0.0
  %716 = vmatpush1.msra.mxu0 0.0
  %717 = vmatprep.subr.mxu0 0.0
  %718 = vmatpush1.msra.mxu0 0.0
  %719 = vmatprep.subr.mxu0 0.0
  %720 = vmatpush1.msra.mxu0 0.0
  %721 = vmatprep.subr.mxu0 0.0
  %722 = vmatpush1.msra.mxu0 0.0
  %723 = vmatprep.subr.mxu0 0.0
  %724 = vmatpush1.msra.mxu0 0.0
  %725 = vmatprep.subr.mxu0 0.0
  %726 = vmatpush1.msra.mxu0 0.0
  %727 = vmatprep.subr.mxu0 0.0
  %728 = vmatpush1.msra.mxu0 0.0
  %729 = vmatprep.subr.mxu0 0.0
  %730 = vmatpush1.msra.mxu0 0.0
  %731 = vmatprep.subr.mxu0 0.0
  %732 = vmatpush1.msra.mxu0 0.0
  %733 = vmatprep.subr.mxu0 0.0
  %734 = vmatpush1.msra.mxu0 0.0
  %735 = vmatprep.subr.mxu0 0.0
  %736 = vmatpush1.msra.mxu0 0.0
  %737 = vmatprep.subr.mxu0 0.0
  %738 = vmatpush1.msra.mxu0 0.0
  %739 = vmatprep.subr.mxu0 0.0
  %740 = vmatpush1.msra.mxu0 0.0
  %741 = vmatprep.subr.mxu0 0.0
  %742 = vmatpush1.msra.mxu0 0.0
  %743 = vmatprep.subr.mxu0 0.0
  %744 = vmatpush1.msra.mxu0 0.0
  %745 = vmatprep.subr.mxu0 0.0
  %746 = vmatpush1.msra.mxu0 0.0
  %747 = vmatprep.subr.mxu0 0.0
  %748 = vmatpush1.msra.mxu0 0.0
  %749 = vmatprep.subr.mxu0 0.0
  %750 = vmatpush1.msra.mxu0 0.0
  %751 = vmatprep.subr.mxu0 0.0
  %752 = vmatpush1.msra.mxu0 0.0
  %753 = vmatprep.subr.mxu0 0.0
  %754 = vmatpush1.msra.mxu0 0.0
  %755 = vmatprep.subr.mxu0 0.0
  %756 = vmatpush1.msra.mxu0 0.0
  %757 = vmatprep.subr.mxu0 0.0
  %758 = vmatpush1.msra.mxu0 0.0
  %759 = vmatprep.subr.mxu0 0.0
  %760 = vmatpush1.msra.mxu0 0.0
  %761 = vmatprep.subr.mxu0 0.0
  %762 = vmatpush1.msra.mxu0 0.0
  %763 = vmatprep.subr.mxu0 0.0
  %764 = vmatpush1.msra.mxu0 0.0
  %765 = vmatprep.mubr.f32.mxu0 0.0
  %766 = vmatmul.mubr.f32.gmra.mrb[0].mxu0 %v699
  %v767 = vpop.f32.mrb[0].mxu0
  %v768 = vadd.f32 0.0, %v767
  %v769 = vpop.f32.mrb[0].mxu0
  %770 = vdwg.mxu0
  %v772 = vsel %vm622, %v696, 0
  %774 = vmatprep.subr.mxu0 0.0
  %775 = vmatpush1.msra.mxu0 %v584
  %776 = vmatprep.subr.mxu0 0.0
  %777 = vmatpush1.msra.mxu0 %v586
  %778 = vmatprep.subr.mxu0 0.0
  %779 = vmatpush1.msra.mxu0 %v588
  %780 = vmatprep.subr.mxu0 0.0
  %781 = vmatpush1.msra.mxu0 %v590
  %782 = vmatprep.subr.mxu0 0.0
  %783 = vmatpush1.msra.mxu0 %v592
  %784 = vmatprep.subr.mxu0 0.0
  %785 = vmatpush1.msra.mxu0 %v594
  %786 = vmatprep.subr.mxu0 0.0
  %787 = vmatpush1.msra.mxu0 %v596
  %788 = vmatprep.subr.mxu0 0.0
  %789 = vmatpush1.msra.mxu0 %v598
  %790 = vmatprep.subr.mxu0 0.0
  %791 = vmatpush1.msra.mxu0 %v600
  %792 = vmatprep.subr.mxu0 0.0
  %793 = vmatpush1.msra.mxu0 %v602
  %794 = vmatprep.subr.mxu0 0.0
  %795 = vmatpush1.msra.mxu0 %v604
  %796 = vmatprep.subr.mxu0 0.0
  %797 = vmatpush1.msra.mxu0 %v606
  %798 = vmatprep.subr.mxu0 0.0
  %799 = vmatpush1.msra.mxu0 %v608
  %800 = vmatprep.subr.mxu0 0.0
  %801 = vmatpush1.msra.mxu0 0.0
  %802 = vmatprep.subr.mxu0 0.0
  %803 = vmatpush1.msra.mxu0 0.0
  %804 = vmatprep.subr.mxu0 0.0
  %805 = vmatpush1.msra.mxu0 0.0
  %806 = vmatprep.subr.mxu0 0.0
  %807 = vmatpush1.msra.mxu0 0.0
  %808 = vmatprep.subr.mxu0 0.0
  %809 = vmatpush1.msra.mxu0 0.0
  %810 = vmatprep.subr.mxu0 0.0
  %811 = vmatpush1.msra.mxu0 0.0
  %812 = vmatprep.subr.mxu0 0.0
  %813 = vmatpush1.msra.mxu0 0.0
  %814 = vmatprep.subr.mxu0 0.0
  %815 = vmatpush1.msra.mxu0 0.0
  %816 = vmatprep.subr.mxu0 0.0
  %817 = vmatpush1.msra.mxu0 0.0
  %818 = vmatprep.subr.mxu0 0.0
  %819 = vmatpush1.msra.mxu0 0.0
  %820 = vmatprep.subr.mxu0 0.0
  %821 = vmatpush1.msra.mxu0 0.0
  %822 = vmatprep.subr.mxu0 0.0
  %823 = vmatpush1.msra.mxu0 0.0
  %824 = vmatprep.subr.mxu0 0.0
  %825 = vmatpush1.msra.mxu0 0.0
  %826 = vmatprep.subr.mxu0 0.0
  %827 = vmatpush1.msra.mxu0 0.0
  %828 = vmatprep.subr.mxu0 0.0
  %829 = vmatpush1.msra.mxu0 0.0
  %830 = vmatprep.subr.mxu0 0.0
  %831 = vmatpush1.msra.mxu0 0.0
  %832 = vmatprep.subr.mxu0 0.0
  %833 = vmatpush1.msra.mxu0 0.0
  %834 = vmatprep.subr.mxu0 0.0
  %835 = vmatpush1.msra.mxu0 0.0
  %836 = vmatprep.subr.mxu0 0.0
  %837 = vmatpush1.msra.mxu0 0.0
  %838 = vmatprep.mubr.f32.mxu0 0.0
  %839 = vmatmul.mubr.f32.gmra.mrb[0].mxu0 %v772
  %v840 = vpop.f32.mrb[0].mxu0
  %v841 = vadd.f32 %v768, %v840
  %v842 = vpop.f32.mrb[0].mxu0
  %843 = vdwg.mxu0
  %v844 = vmul.f32 %v693, %v693
  %v845 = vsub.f32 %v844, %v841
  %v846 = vmul.f32 %v845, 0.5
  %vm847 = vcmask 31744
  %v848 = vsel %vm847, %v846, 0.0
  %849 = vadd.xlane.f32.xlu0 %v848
  %v850 = vpop.xlane.xlu0 %849
  %851 = vmatprep.subr.mxu0 0.0
  %852 = vmatpush1.msra.mxu0 %v69
  %853 = vmatprep.subr.mxu0 0.0
  %854 = vmatpush1.msra.mxu0 %v70
  %855 = vmatprep.subr.mxu0 0.0
  %856 = vmatpush1.msra.mxu0 %v71
  %857 = vmatprep.subr.mxu0 0.0
  %858 = vmatpush1.msra.mxu0 %v72
  %859 = vmatprep.subr.mxu0 0.0
  %860 = vmatpush1.msra.mxu0 %v73
  %861 = vmatprep.subr.mxu0 0.0
  %862 = vmatpush1.msra.mxu0 0.0
  %863 = vmatprep.subr.mxu0 0.0
  %864 = vmatpush1.msra.mxu0 0.0
  %865 = vmatprep.subr.mxu0 0.0
  %866 = vmatpush1.msra.mxu0 0.0
  %867 = vmatprep.subr.mxu0 0.0
  %868 = vmatpush1.msra.mxu0 0.0
  %869 = vmatprep.subr.mxu0 0.0
  %870 = vmatpush1.msra.mxu0 0.0
  %871 = vmatprep.subr.mxu0 0.0
  %872 = vmatpush1.msra.mxu0 0.0
  %873 = vmatprep.subr.mxu0 0.0
  %874 = vmatpush1.msra.mxu0 0.0
  %875 = vmatprep.subr.mxu0 0.0
  %876 = vmatpush1.msra.mxu0 0.0
  %877 = vmatprep.subr.mxu0 0.0
  %878 = vmatpush1.msra.mxu0 0.0
  %879 = vmatprep.subr.mxu0 0.0
  %880 = vmatpush1.msra.mxu0 0.0
  %881 = vmatprep.subr.mxu0 0.0
  %882 = vmatpush1.msra.mxu0 0.0
  %883 = vmatprep.subr.mxu0 0.0
  %884 = vmatpush1.msra.mxu0 0.0
  %885 = vmatprep.subr.mxu0 0.0
  %886 = vmatpush1.msra.mxu0 0.0
  %887 = vmatprep.subr.mxu0 0.0
  %888 = vmatpush1.msra.mxu0 0.0
  %889 = vmatprep.subr.mxu0 0.0
  %890 = vmatpush1.msra.mxu0 0.0
  %891 = vmatprep.subr.mxu0 0.0
  %892 = vmatpush1.msra.mxu0 0.0
  %893 = vmatprep.subr.mxu0 0.0
  %894 = vmatpush1.msra.mxu0 0.0
  %895 = vmatprep.subr.mxu0 0.0
  %896 = vmatpush1.msra.mxu0 0.0
  %897 = vmatprep.subr.mxu0 0.0
  %898 = vmatpush1.msra.mxu0 0.0
  %899 = vmatprep.subr.mxu0 0.0
  %900 = vmatpush1.msra.mxu0 0.0
  %901 = vmatprep.subr.mxu0 0.0
  %902 = vmatpush1.msra.mxu0 0.0
  %903 = vmatprep.subr.mxu0 0.0
  %904 = vmatpush1.msra.mxu0 0.0
  %905 = vmatprep.subr.mxu0 0.0
  %906 = vmatpush1.msra.mxu0 0.0
  %907 = vmatprep.subr.mxu0 0.0
  %908 = vmatpush1.msra.mxu0 0.0
  %909 = vmatprep.subr.mxu0 0.0
  %910 = vmatpush1.msra.mxu0 0.0
  %911 = vmatprep.subr.mxu0 0.0
  %912 = vmatpush1.msra.mxu0 0.0
  %913 = vmatprep.subr.mxu0 0.0
  %914 = vmatpush1.msra.mxu0 0.0
  %915 = vmatprep.mubr.f32.mxu0 0.0
  %916 = vmatmul.mubr.f32.gmra.mrb[0].mxu0 %v498
  %v917 = vpop.f32.mrb[0].mxu0
  %v918 = vadd.f32 0.0, %v917
  %v919 = vpop.f32.mrb[0].mxu0
  %920 = vdwg.mxu0
  %921 = vmatprep.subr.mxu0 0.0
  %922 = vmatpush1.msra.mxu0 %v56
  %923 = vmatprep.subr.mxu0 0.0
  %924 = vmatpush1.msra.mxu0 %v57
  %925 = vmatprep.subr.mxu0 0.0
  %926 = vmatpush1.msra.mxu0 %v58
  %927 = vmatprep.subr.mxu0 0.0
  %928 = vmatpush1.msra.mxu0 %v59
  %929 = vmatprep.subr.mxu0 0.0
  %930 = vmatpush1.msra.mxu0 %v60
  %931 = vmatprep.subr.mxu0 0.0
  %932 = vmatpush1.msra.mxu0 %v61
  %933 = vmatprep.subr.mxu0 0.0
  %934 = vmatpush1.msra.mxu0 %v62
  %935 = vmatprep.subr.mxu0 0.0
  %936 = vmatpush1.msra.mxu0 %v63
  %937 = vmatprep.subr.mxu0 0.0
  %938 = vmatpush1.msra.mxu0 %v64
  %939 = vmatprep.subr.mxu0 0.0
  %940 = vmatpush1.msra.mxu0 %v65
  %941 = vmatprep.subr.mxu0 0.0
  %942 = vmatpush1.msra.mxu0 %v66
  %943 = vmatprep.subr.mxu0 0.0
  %944 = vmatpush1.msra.mxu0 %v67
  %945 = vmatprep.subr.mxu0 0.0
  %946 = vmatpush1.msra.mxu0 %v68
  %947 = vmatprep.subr.mxu0 0.0
  %948 = vmatpush1.msra.mxu0 0.0
  %949 = vmatprep.subr.mxu0 0.0
  %950 = vmatpush1.msra.mxu0 0.0
  %951 = vmatprep.subr.mxu0 0.0
  %952 = vmatpush1.msra.mxu0 0.0
  %953 = vmatprep.subr.mxu0 0.0
  %954 = vmatpush1.msra.mxu0 0.0
  %955 = vmatprep.subr.mxu0 0.0
  %956 = vmatpush1.msra.mxu0 0.0
  %957 = vmatprep.subr.mxu0 0.0
  %958 = vmatpush1.msra.mxu0 0.0
  %959 = vmatprep.subr.mxu0 0.0
  %960 = vmatpush1.msra.mxu0 0.0
  %961 = vmatprep.subr.mxu0 0.0
  %962 = vmatpush1.msra.mxu0 0.0
  %963 = vmatprep.subr.mxu0 0.0
  %964 = vmatpush1.msra.mxu0 0.0
  %965 = vmatprep.subr.mxu0 0.0
  %966 = vmatpush1.msra.mxu0 0.0
  %967 = vmatprep.subr.mxu0 0.0
  %968 = vmatpush1.msra.mxu0 0.0
  %969 = vmatprep.subr.mxu0 0.0
  %970 = vmatpush1.msra.mxu0 0.0
  %971 = vmatprep.subr.mxu0 0.0
  %972 = vmatpush1.msra.mxu0 0.0
  %973 = vmatprep.subr.mxu0 0.0
  %974 = vmatpush1.msra.mxu0 0.0
  %975 = vmatprep.subr.mxu0 0.0
  %976 = vmatpush1.msra.mxu0 0.0
  %977 = vmatprep.subr.mxu0 0.0
  %978 = vmatpush1.msra.mxu0 0.0
  %979 = vmatprep.subr.mxu0 0.0
  %980 = vmatpush1.msra.mxu0 0.0
  %981 = vmatprep.subr.mxu0 0.0
  %982 = vmatpush1.msra.mxu0 0.0
  %983 = vmatprep.subr.mxu0 0.0
  %984 = vmatpush1.msra.mxu0 0.0
  %985 = vmatprep.mubr.f32.mxu0 0.0
  %986 = vmatmul.mubr.f32.gmra.mrb[0].mxu0 %v624
  %v987 = vpop.f32.mrb[0].mxu0
  %v988 = vadd.f32 %v918, %v987
  %v989 = vpop.f32.mrb[0].mxu0
  %990 = vdwg.mxu0
  %v991 = vlaneseq
  %v992 = vshrl.u32 %v991, 7
  %v993 = vsub.s32 0, %v992
  %v994 = vrot.slane %v78, %v993
  %v995 = vadd.f32 %v988, %v994
  %vm996 = vcmask 261120
  %v997 = vsel %vm996, %v995, 0.0
  %v998 = vrot.slane %v997, 4
  %v999 = vadd.f32 %v997, %v998
  %v1000 = vrot.slane %v999, 2
  %v1001 = vadd.f32 %v999, %v1000
  %v1002 = vrot.slane %v1001, 1
  %v1003 = vadd.f32 %v1001, %v1002
  %v1004 = vrcp.pop 8.0
  %v1005 = vmul.f32 %v1003, %v1004
  %v1006 = vsub.f32 %v995, %v1005
  %v1007 = vmul.f32 %v1006, %v1006
  %v1008 = vsel %vm996, %v1007, 0.0
  %v1009 = vrot.slane %v1008, 4
  %v1010 = vadd.f32 %v1008, %v1009
  %v1011 = vrot.slane %v1010, 2
  %v1012 = vadd.f32 %v1010, %v1011
  %v1013 = vrot.slane %v1012, 1
  %v1014 = vadd.f32 %v1012, %v1013
  %v1015 = vmul.f32 %v1014, %v1004
  %v1016 = vadd.f32 %v1015, 1e-05
  %v1017 = vrsqrt.pop %v1016
  %v1018 = vmul.f32 %v79, %v1017
  %v1019 = vlaneseq
  %v1020 = vshrl.u32 %v1019, 7
  %v1021 = vsub.s32 0, %v1020
  %v1022 = vrot.slane %v1018, %v1021
  %v1023 = vmul.f32 %v995, %v1022
  %v1024 = vmul.f32 %v1005, %v1018
  %v1025 = vsub.f32 %v80, %v1024
  %v1026 = vlaneseq
  %v1027 = vshrl.u32 %v1026, 7
  %v1028 = vsub.s32 0, %v1027
  %v1029 = vrot.slane %v1025, %v1028
  %v1030 = vadd.f32 %v1023, %v1029
  %v1031 = vlaneseq
  %v1032 = vshrl.u32 %v1031, 7
  %v1033 = vsub.s32 0, %v1032
  %v1034 = vrot.slane %v81, %v1033
  %v1036 = vsel %vm996, %v1030, 0
  %1038 = vmatprep.subr.mxu0 0.0
  %1039 = vmatpush1.msra.mxu0 %v74
  %1040 = vmatprep.subr.mxu0 0.0
  %1041 = vmatpush1.msra.mxu0 %v75
  %1042 = vmatprep.subr.mxu0 0.0
  %1043 = vmatpush1.msra.mxu0 %v76
  %1044 = vmatprep.subr.mxu0 0.0
  %1045 = vmatpush1.msra.mxu0 %v77
  %1046 = vmatprep.subr.mxu0 0.0
  %1047 = vmatpush1.msra.mxu0 0.0
  %1048 = vmatprep.subr.mxu0 0.0
  %1049 = vmatpush1.msra.mxu0 0.0
  %1050 = vmatprep.subr.mxu0 0.0
  %1051 = vmatpush1.msra.mxu0 0.0
  %1052 = vmatprep.subr.mxu0 0.0
  %1053 = vmatpush1.msra.mxu0 0.0
  %1054 = vmatprep.subr.mxu0 0.0
  %1055 = vmatpush1.msra.mxu0 0.0
  %1056 = vmatprep.subr.mxu0 0.0
  %1057 = vmatpush1.msra.mxu0 0.0
  %1058 = vmatprep.subr.mxu0 0.0
  %1059 = vmatpush1.msra.mxu0 0.0
  %1060 = vmatprep.subr.mxu0 0.0
  %1061 = vmatpush1.msra.mxu0 0.0
  %1062 = vmatprep.subr.mxu0 0.0
  %1063 = vmatpush1.msra.mxu0 0.0
  %1064 = vmatprep.subr.mxu0 0.0
  %1065 = vmatpush1.msra.mxu0 0.0
  %1066 = vmatprep.subr.mxu0 0.0
  %1067 = vmatpush1.msra.mxu0 0.0
  %1068 = vmatprep.subr.mxu0 0.0
  %1069 = vmatpush1.msra.mxu0 0.0
  %1070 = vmatprep.subr.mxu0 0.0
  %1071 = vmatpush1.msra.mxu0 0.0
  %1072 = vmatprep.subr.mxu0 0.0
  %1073 = vmatpush1.msra.mxu0 0.0
  %1074 = vmatprep.subr.mxu0 0.0
  %1075 = vmatpush1.msra.mxu0 0.0
  %1076 = vmatprep.subr.mxu0 0.0
  %1077 = vmatpush1.msra.mxu0 0.0
  %1078 = vmatprep.subr.mxu0 0.0
  %1079 = vmatpush1.msra.mxu0 0.0
  %1080 = vmatprep.subr.mxu0 0.0
  %1081 = vmatpush1.msra.mxu0 0.0
  %1082 = vmatprep.subr.mxu0 0.0
  %1083 = vmatpush1.msra.mxu0 0.0
  %1084 = vmatprep.subr.mxu0 0.0
  %1085 = vmatpush1.msra.mxu0 0.0
  %1086 = vmatprep.subr.mxu0 0.0
  %1087 = vmatpush1.msra.mxu0 0.0
  %1088 = vmatprep.subr.mxu0 0.0
  %1089 = vmatpush1.msra.mxu0 0.0
  %1090 = vmatprep.subr.mxu0 0.0
  %1091 = vmatpush1.msra.mxu0 0.0
  %1092 = vmatprep.subr.mxu0 0.0
  %1093 = vmatpush1.msra.mxu0 0.0
  %1094 = vmatprep.subr.mxu0 0.0
  %1095 = vmatpush1.msra.mxu0 0.0
  %1096 = vmatprep.subr.mxu0 0.0
  %1097 = vmatpush1.msra.mxu0 0.0
  %1098 = vmatprep.subr.mxu0 0.0
  %1099 = vmatpush1.msra.mxu0 0.0
  %1100 = vmatprep.subr.mxu0 0.0
  %1101 = vmatpush1.msra.mxu0 0.0
  %1102 = vmatprep.mubr.f32.mxu0 0.0
  %1103 = vmatmul.mubr.f32.gmra.mrb[0].mxu0 %v1036
  %v1104 = vpop.f32.mrb[0].mxu0
  %v1105 = vadd.f32 %v1034, %v1104
  %v1106 = vpop.f32.mrb[0].mxu0
  %1107 = vdwg.mxu0
  %v1108 = vsel %vm996, %v1105, 0.0
  %v1109 = vrot.slane %v1108, 4
  %v1110 = vadd.f32 %v1108, %v1109
  %v1111 = vrot.slane %v1110, 2
  %v1112 = vadd.f32 %v1110, %v1111
  %v1113 = vrot.slane %v1112, 1
  %v1114 = vadd.f32 %v1112, %v1113
  %v1115 = vmul.f32 %v1114, %v1004
  %v1116 = vsub.f32 %v1105, %v1115
  %v1117 = vmul.f32 %v1116, %v1116
  %v1118 = vsel %vm996, %v1117, 0.0
  %v1119 = vrot.slane %v1118, 4
  %v1120 = vadd.f32 %v1118, %v1119
  %v1121 = vrot.slane %v1120, 2
  %v1122 = vadd.f32 %v1120, %v1121
  %v1123 = vrot.slane %v1122, 1
  %v1124 = vadd.f32 %v1122, %v1123
  %v1125 = vmul.f32 %v1124, %v1004
  %v1126 = vadd.f32 %v1125, 1e-05
  %v1127 = vrsqrt.pop %v1126
  %v1128 = vmul.f32 %v82, %v1127
  %v1129 = vlaneseq
  %v1130 = vshrl.u32 %v1129, 7
  %v1131 = vsub.s32 0, %v1130
  %v1132 = vrot.slane %v1128, %v1131
  %v1133 = vmul.f32 %v1105, %v1132
  %v1134 = vmul.f32 %v1115, %v1128
  %v1135 = vsub.f32 %v83, %v1134
  %v1136 = vlaneseq
  %v1137 = vshrl.u32 %v1136, 7
  %v1138 = vsub.s32 0, %v1137
  %v1139 = vrot.slane %v1135, %v1138
  %v1140 = vadd.f32 %v1133, %v1139
  %v1142 = vsel %vm996, %v1140, 0
  %1144 = vmatprep.subr.mxu0 0.0
  %1145 = vmatpush1.msra.mxu0 1.0
  %1146 = vmatprep.subr.mxu0 0.0
  %1147 = vmatpush1.msra.mxu0 1.0
  %1148 = vmatprep.subr.mxu0 0.0
  %1149 = vmatpush1.msra.mxu0 1.0
  %1150 = vmatprep.subr.mxu0 0.0
  %1151 = vmatpush1.msra.mxu0 1.0
  %1152 = vmatprep.subr.mxu0 0.0
  %1153 = vmatpush1.msra.mxu0 0.0
  %1154 = vmatprep.subr.mxu0 0.0
  %1155 = vmatpush1.msra.mxu0 0.0
  %1156 = vmatprep.subr.mxu0 0.0
  %1157 = vmatpush1.msra.mxu0 0.0
  %1158 = vmatprep.subr.mxu0 0.0
  %1159 = vmatpush1.msra.mxu0 0.0
  %1160 = vmatprep.subr.mxu0 0.0
  %1161 = vmatpush1.msra.mxu0 0.0
  %1162 = vmatprep.subr.mxu0 0.0
  %1163 = vmatpush1.msra.mxu0 0.0
  %1164 = vmatprep.subr.mxu0 0.0
  %1165 = vmatpush1.msra.mxu0 0.0
  %1166 = vmatprep.subr.mxu0 0.0
  %1167 = vmatpush1.msra.mxu0 0.0
  %1168 = vmatprep.subr.mxu0 0.0
  %1169 = vmatpush1.msra.mxu0 0.0
  %1170 = vmatprep.subr.mxu0 0.0
  %1171 = vmatpush1.msra.mxu0 0.0
  %1172 = vmatprep.subr.mxu0 0.0
  %1173 = vmatpush1.msra.mxu0 0.0
  %1174 = vmatprep.subr.mxu0 0.0
  %1175 = vmatpush1.msra.mxu0 0.0
  %1176 = vmatprep.subr.mxu0 0.0
  %1177 = vmatpush1.msra.mxu0 0.0
  %1178 = vmatprep.subr.mxu0 0.0
  %1179 = vmatpush1.msra.mxu0 0.0
  %1180 = vmatprep.subr.mxu0 0.0
  %1181 = vmatpush1.msra.mxu0 0.0
  %1182 = vmatprep.subr.mxu0 0.0
  %1183 = vmatpush1.msra.mxu0 0.0
  %1184 = vmatprep.subr.mxu0 0.0
  %1185 = vmatpush1.msra.mxu0 0.0
  %1186 = vmatprep.subr.mxu0 0.0
  %1187 = vmatpush1.msra.mxu0 0.0
  %1188 = vmatprep.subr.mxu0 0.0
  %1189 = vmatpush1.msra.mxu0 0.0
  %1190 = vmatprep.subr.mxu0 0.0
  %1191 = vmatpush1.msra.mxu0 0.0
  %1192 = vmatprep.subr.mxu0 0.0
  %1193 = vmatpush1.msra.mxu0 0.0
  %1194 = vmatprep.subr.mxu0 0.0
  %1195 = vmatpush1.msra.mxu0 0.0
  %1196 = vmatprep.subr.mxu0 0.0
  %1197 = vmatpush1.msra.mxu0 0.0
  %1198 = vmatprep.subr.mxu0 0.0
  %1199 = vmatpush1.msra.mxu0 0.0
  %1200 = vmatprep.subr.mxu0 0.0
  %1201 = vmatpush1.msra.mxu0 0.0
  %1202 = vmatprep.subr.mxu0 0.0
  %1203 = vmatpush1.msra.mxu0 0.0
  %1204 = vmatprep.subr.mxu0 0.0
  %1205 = vmatpush1.msra.mxu0 0.0
  %1206 = vmatprep.subr.mxu0 0.0
  %1207 = vmatpush1.msra.mxu0 0.0
  %1208 = vmatprep.mubr.f32.mxu0 0.0
  %1209 = vmatmul.mubr.f32.gmra.mrb[0].mxu0 %v1142
  %v1210 = vpop.f32.mrb[0].mxu0
  %v1211 = vadd.f32 0.0, %v1210
  %v1212 = vpop.f32.mrb[0].mxu0
  %1213 = vdwg.mxu0
  %v1214 = vadd.f32 %v693, %v850
  %1216 = vrot.lane.b32.xlu0 %v1211, 4
  %v1217 = vpop.permute.xlu0 %1216
  %v1219 = vadd.f32 %v1214, %v1217
  %1221 = vrot.lane.b32.xlu0 %v31, 4
  %v1222 = vpop.permute.xlu0 %1221
  %v1224 = vadd.f32 %v1219, %v1222
  %1226 = vrot.lane.b32.xlu0 %v1224, 124
  %v1227 = vpop.permute.xlu0 %1226
  %vm1229 = vcmask 7168
  %1230 = vst.msk [vmem:[%s8] sm:$0xff] %vm1229, %v1227
  // Predicated region
  $region34: #{deepfm_pallas.1} parent=0 // pred_check
    _
  $region35: #{deepfm_pallas.1} parent=0 // pred_check_branch
    %1232 = sbr.rel (0) target = $region37
  $region36: #{deepfm_pallas.1} parent=0 // pred_region
    _
  $region37: #{deepfm_pallas.1} parent=0 // pred_fallthru
    _
  // Predicated region
  $region38: #{deepfm_pallas.1} parent=0 // pred_check
    _
  $region39: #{deepfm_pallas.1} parent=0 // pred_check_branch
    %1234 = sbr.rel (0) target = $region41
  $region40: #{deepfm_pallas.1} parent=0 // pred_region
    _
  $region41: #{deepfm_pallas.1} parent=0 // pred_fallthru
    _

</llo_original>
